<compile_context>
chip_gen: v7x
topology: tpu7x:2x2x1
jax: 0.10.0
libtpu: 0.0.40
codegen_flags: <defaults>
</compile_context>

<pallas_src>
import jax
import jax.numpy as jnp
from jax.experimental import pallas as pl
from jax.experimental.pallas import tpu as pltpu

# ----------------------------- model config ---------------------------------
BATCH = 2
SEQ = 8
HIDDEN = 64
NUM_HEADS = 4
HEAD_DIM = HIDDEN // NUM_HEADS          # 16
INTER = 128                             # MLP intermediate size
VOCAB = 128
NUM_LAYERS = 2
ROPE_THETA = 10000.0
EPS = 1e-6
NEG_INF = float(jnp.finfo(jnp.float32).min)

BS = BATCH * SEQ                        # tokens = matmul M dimension = 16
QKV_W = 5 * HIDDEN                      # fused [q|k|q_rot|k_rot|v] width = 320
GU_W = 2 * INTER                        # fused [gate|up] width = 256
assert BS % 2 == 0 and 2 * HIDDEN == 128   # lane-dense output packing assumption

# "runtime_config.workers": each worker owns a slice of decoder layers.  The
# RPC pipeline is emulated sequentially in one process, so the slices fuse.
WORKER_OFFSETS = [(0, 1), (1, 2)]


# ----------------------------- kernel helpers --------------------------------
def _rmsnorm(x, w):
    # x: (BS, H) f32, w: (1, H) f32
    var = jnp.mean(x * x, axis=-1, keepdims=True)
    return x * jax.lax.rsqrt(var + EPS) * w


# ----------------------------- Pallas kernel ---------------------------------
def llama_stack_kernel(x_ref, cosf_ref, sinf_ref, bias_ref, bm_ref,
                       n1_ref, wqkv_ref, wo_ref, n2_ref, wgu_ref, wd_ref,
                       fn_ref, out_ref):
    """Full decoder stack (all layers + final RMSNorm) on (B*S, H) activations."""
    x = x_ref[...]                       # (BS, H) f32
    cosf = cosf_ref[...]                 # (BS, 2H) f32 — per-head tiled cos for [q|k]
    sinf = sinf_ref[...]                 # (BS, 2H) f32
    bias = bias_ref[...]                 # (BS, NH*BS) f32 — additive causal+batch mask
    bm = bm_ref[...]                     # (NH*BS, H) f32  — 0/1 head block mask

    for l in range(NUM_LAYERS):          # static unroll; all weights VMEM-resident
        # ---------------- self-attention ----------------
        h = _rmsnorm(x, n1_ref[l])                       # input_layernorm (f32)
        hb = h.astype(jnp.bfloat16)
        # fused q|k|q_rot|k_rot|v projection: one (16,64)@(64,320) matmul
        qkv = jnp.dot(hb, wqkv_ref[l], preferred_element_type=jnp.float32)

        # RoPE (HF rotate_half folded into weights): two (16,128) elementwise ops
        qk = qkv[:, :2 * HIDDEN] * cosf + qkv[:, 2 * HIDDEN:4 * HIDDEN] * sinf
        q2 = qk[:, :HIDDEN]                              # (BS, H), 1/sqrt(D) pre-folded
        k2 = qk[:, HIDDEN:]                              # (BS, H)
        v2 = qkv[:, 4 * HIDDEN:]                         # (BS, H)

        # Block-diagonal key/value: row r = h*BS + t_k, masked to head h's features.
        kbig = (jnp.concatenate([k2, k2, k2, k2], axis=0) * bm).astype(jnp.bfloat16)
        vbig = (jnp.concatenate([v2, v2, v2, v2], axis=0) * bm).astype(jnp.bfloat16)

        # scores[t_q, h*BS + t_k] = q_head_h(t_q) . k_head_h(t_k)   (one wide matmul)
        s = jax.lax.dot_general(q2.astype(jnp.bfloat16), kbig,
                                (((1,), (1,)), ((), ())),
                                preferred_element_type=jnp.float32)   # (BS, NH*BS)
        s = s + bias
        # per-row max upper-bounds every head segment's max; constant cancels per segment
        s = s - jnp.max(s, axis=-1, keepdims=True)
        p = jnp.exp(s)                                    # f32, masked entries -> 0
        # per-head segment sums broadcast per feature column (one f32 matmul)
        denom = jnp.dot(p, bm, preferred_element_type=jnp.float32)    # (BS, H)
        # unnormalized context already lands in (BS, NH*D) layout — no reshape back
        ctx = jnp.dot(p.astype(jnp.bfloat16), vbig,
                      preferred_element_type=jnp.float32)             # (BS, H)
        ctx = (ctx * pl.reciprocal(denom, approx=True)).astype(jnp.bfloat16)
        x = x + jnp.dot(ctx, wo_ref[l], preferred_element_type=jnp.float32)

        # ---------------- MLP (SwiGLU) ----------------
        h2 = _rmsnorm(x, n2_ref[l])                       # post_attention_layernorm
        h2b = h2.astype(jnp.bfloat16)
        gu = jnp.dot(h2b, wgu_ref[l], preferred_element_type=jnp.float32)  # (BS, 256)
        g = gu[:, :INTER]                                 # vreg-aligned split at lane 128
        u = gu[:, INTER:]
        act = (g * jax.lax.logistic(g) * u).astype(jnp.bfloat16)      # SiLU(g)*u in f32
        x = x + jnp.dot(act, wd_ref[l], preferred_element_type=jnp.float32)

    y = _rmsnorm(x, fn_ref[...])                          # final model RMSNorm
    # Lane-dense output: pack (BS, H) = (16, 64) into (BS//2, 2H) = (8, 128).
    out_ref[...] = jnp.concatenate([y[:BS // 2, :], y[BS // 2:, :]], axis=-1)


# ----------------------------- Pallas wrapper ---------------------------------
def run_llama_stack(hidden, cosf, sinf, bias, bm, packed):
    i2 = lambda i: (0, 0)
    i3 = lambda i: (0, 0, 0)
    L, H = NUM_LAYERS, HIDDEN
    in_specs = [
        pl.BlockSpec((BS, H), i2),                   # hidden states (B folded into M)
        pl.BlockSpec((BS, 2 * H), i2),               # cos tiled for [q|k] slab
        pl.BlockSpec((BS, 2 * H), i2),               # sin tiled for [q|k] slab
        pl.BlockSpec((BS, NUM_HEADS * BS), i2),      # additive causal+batch bias
        pl.BlockSpec((NUM_HEADS * BS, H), i2),       # head block mask
        pl.BlockSpec((L, 1, H), i3),                 # input_layernorm weights
        pl.BlockSpec((L, H, QKV_W), i3),             # fused q|k|q_rot|k_rot|v weights
        pl.BlockSpec((L, H, H), i3),                 # o_proj
        pl.BlockSpec((L, 1, H), i3),                 # post_attention_layernorm weights
        pl.BlockSpec((L, H, GU_W), i3),              # fused gate|up
        pl.BlockSpec((L, INTER, H), i3),             # down_proj
        pl.BlockSpec((1, H), i2),                    # final norm
    ]
    # Single fused invocation (grid=(1,)): no per-layer launches; weights < 0.25 MiB
    # stay VMEM-resident for the whole forward.
    return pl.pallas_call(
        llama_stack_kernel,
        out_shape=jax.ShapeDtypeStruct((BS // 2, 2 * HIDDEN), jnp.float32),
        grid=(1,),
        in_specs=in_specs,
        out_specs=pl.BlockSpec((BS // 2, 2 * HIDDEN), i2),
        compiler_params=pltpu.CompilerParams(
            dimension_semantics=("arbitrary",),
            vmem_limit_bytes=32 * 1024 * 1024),      # explicit VMEM cap (v7x guard)
    )(hidden, cosf, sinf, bias, bm,
      packed["n1"], packed["wqkv"], packed["wo"], packed["n2"],
      packed["wgu"], packed["wd"], packed["final_norm"])


# ----------------------------- parameter handling -----------------------------
def init_params(key):
    """Deterministic synthetic weights (shapes match LlamaDecoderLayer).
    Projection weights are (in_features, out_features): kernel computes x @ W."""
    keys = jax.random.split(key, 1 + NUM_LAYERS)
    params = {
        "embed_tokens": jax.random.normal(keys[0], (VOCAB, HIDDEN), jnp.float32) * 0.02,
        "final_norm": jnp.ones((1, HIDDEN), jnp.float32),
        "layers": [],
    }
    for li in range(NUM_LAYERS):
        lk = jax.random.split(keys[1 + li], 7)
        s = 0.02
        params["layers"].append({
            "input_norm": jnp.ones((1, HIDDEN), jnp.float32),
            "wq": jax.random.normal(lk[0], (HIDDEN, HIDDEN), jnp.float32) * s,
            "wk": jax.random.normal(lk[1], (HIDDEN, HIDDEN), jnp.float32) * s,
            "wv": jax.random.normal(lk[2], (HIDDEN, HIDDEN), jnp.float32) * s,
            "wo": jax.random.normal(lk[3], (HIDDEN, HIDDEN), jnp.float32) * s,
            "post_norm": jnp.ones((1, HIDDEN), jnp.float32),
            "wg": jax.random.normal(lk[4], (HIDDEN, INTER), jnp.float32) * s,
            "wu": jax.random.normal(lk[5], (HIDDEN, INTER), jnp.float32) * s,
            "wd": jax.random.normal(lk[6], (INTER, HIDDEN), jnp.float32) * s,
        })
    return params


def pack_weights(params):
    """Pre-arrange weights for the fused kernel:
       * wqkv = [wq*scale | wk | rot(wq)*scale | rot(wk) | wv]   (L, H, 5H) bf16
         (rotate_half and the 1/sqrt(D) softmax scale folded in at pack time)
       * wgu  = [wg | wu]                                        (L, H, 2*INTER) bf16
       * wo / wd plain per-layer stacks, bf16; norms stay f32."""
    half = HEAD_DIM // 2
    scale = 1.0 / (HEAD_DIM ** 0.5)

    def rot_cols(w):
        # weight whose output columns produce rotate_half(x @ w) per head
        w4 = w.reshape(HIDDEN, NUM_HEADS, HEAD_DIM)
        wr = jnp.concatenate([-w4[..., half:], w4[..., :half]], axis=-1)
        return wr.reshape(HIDDEN, HIDDEN)

    L = params["layers"]
    bf = jnp.bfloat16
    wqkv = jnp.stack([
        jnp.concatenate([l["wq"] * scale, l["wk"],
                         rot_cols(l["wq"]) * scale, rot_cols(l["wk"]),
                         l["wv"]], axis=1)
        for l in L]).astype(bf)                                           # (L, H, 5H)
    wgu = jnp.stack([jnp.concatenate([l["wg"], l["wu"]], axis=1)
                     for l in L]).astype(bf)                              # (L, H, 2I)
    return {
        "embed_tokens": params["embed_tokens"],
        "final_norm": params["final_norm"],                               # f32
        "n1": jnp.stack([l["input_norm"] for l in L]),                    # (L,1,H) f32
        "n2": jnp.stack([l["post_norm"] for l in L]),
        "wqkv": wqkv,
        "wo": jnp.stack([l["wo"] for l in L]).astype(bf),                 # (L,H,H)
        "wgu": wgu,
        "wd": jnp.stack([l["wd"] for l in L]).astype(bf),                 # (L,INTER,H)
    }


def rotary_embeddings(position_ids):
    # position_ids: (S,) int32 -> cos/sin: (S, HEAD_DIM), HF convention emb=cat(freqs,freqs)
    inv_freq = 1.0 / (ROPE_THETA ** (jnp.arange(0, HEAD_DIM, 2, dtype=jnp.float32) / HEAD_DIM))
    freqs = position_ids.astype(jnp.float32)[:, None] * inv_freq[None, :]
    emb = jnp.concatenate([freqs, freqs], axis=-1)
    return jnp.cos(emb), jnp.sin(emb)


def _attention_bias():
    """Additive (BS, NH*BS) mask: 0 where same batch & causal, NEG_INF otherwise."""
    t = jnp.arange(BS, dtype=jnp.int32)
    b, s = t // SEQ, t % SEQ
    valid = (b[:, None] == b[None, :]) & (s[None, :] <= s[:, None])       # (BS, BS)
    bias_tok = jnp.where(valid, 0.0, NEG_INF).astype(jnp.float32)
    return jnp.tile(bias_tok, (1, NUM_HEADS))                             # (BS, NH*BS)


def _head_block_mask():
    """(NH*BS, H) 0/1 mask: row r (= h*BS + t_k) active only on head h's features."""
    r = jnp.arange(NUM_HEADS * BS, dtype=jnp.int32) // BS
    c = jnp.arange(HIDDEN, dtype=jnp.int32) // HEAD_DIM
    return (r[:, None] == c[None, :]).astype(jnp.float32)


def llama_forward(packed, input_ids):
    """Stage-0 prologue (embedding gather + rotary + mask) + fused decoder stack."""
    B, S = input_ids.shape
    hidden = jnp.take(packed["embed_tokens"], input_ids.reshape(-1), axis=0)   # (B*S, H)
    cache_position = jnp.arange(S, dtype=jnp.int32)
    cos, sin = rotary_embeddings(cache_position)                               # (S, D)
    cosf = jnp.tile(cos, (BATCH, 2 * NUM_HEADS))                               # (BS, 2H)
    sinf = jnp.tile(sin, (BATCH, 2 * NUM_HEADS))
    bias = _attention_bias()
    bm = _head_block_mask()
    out_packed = run_llama_stack(hidden, cosf, sinf, bias, bm, packed)         # (BS//2, 2H)
    last = jnp.concatenate([out_packed[:, :HIDDEN], out_packed[:, HIDDEN:]], axis=0)
    return last.reshape(B, S, HIDDEN)


# ------------------- pipeline (emulating the RPC workers) --------------------
class DistributedModel:
    """Pallas/JAX equivalent of the RPC pipeline.

    The per-worker layer slices (WORKER_OFFSETS) execute back-to-back in one
    process, so the pipeline collapses into a single fused Pallas kernel
    covering all decoder layers + the final RMSNorm; the forward semantics are
    identical to running the CustomLlamaModel stages sequentially.
    """

    def __init__(self, params):
        self.offsets = WORKER_OFFSETS
        assert self.offsets[0][0] == 0 and self.offsets[-1][1] == NUM_LAYERS
        self.packed = pack_weights(params)
        self._fwd = jax.jit(llama_forward)

    def forward(self, **input_data):
        input_ids = input_data["input_ids"]
        last_hidden = self._fwd(self.packed, input_ids)
        return {"last_hidden_state": last_hidden,
                "past_key_values": None,   # TODO(synk): KV cache (use_cache) not materialized
                "hidden_states": None,
                "attentions": None}


# --------------------------------- main --------------------------------------
if __name__ == "__main__":
    key = jax.random.PRNGKey(0)
    pkey, dkey = jax.random.split(key)
    params = init_params(pkey)

    input_ids = jax.random.randint(dkey, (BATCH, SEQ), 0, VOCAB, dtype=jnp.int32)

    model = DistributedModel(params)
    result = model.forward(input_ids=input_ids,
                           attention_mask=None,
                           use_cache=False,
                           output_attentions=False,
                           output_hidden_states=False,
                           return_dict=True)

    last_hidden = jax.block_until_ready(result["last_hidden_state"])
    assert last_hidden.shape == (BATCH, SEQ, HIDDEN)
    assert bool(jnp.all(jnp.isfinite(last_hidden)))
    print("KERNEL_OK")
</pallas_src>

<mosaic_0001>
module attributes {stable_mosaic.version = 11 : i64} {
  func.func @llama_stack_kernel(%arg0: i32, %arg1: memref<16x64xf32, #tpu.memory_space<vmem>>, %arg2: memref<16x128xf32, #tpu.memory_space<vmem>>, %arg3: memref<16x128xf32, #tpu.memory_space<vmem>>, %arg4: memref<16x64xf32, #tpu.memory_space<vmem>>, %arg5: memref<64x64xf32, #tpu.memory_space<vmem>>, %arg6: memref<2x1x64xf32, #tpu.memory_space<vmem>>, %arg7: memref<2x64x320xbf16, #tpu.memory_space<vmem>>, %arg8: memref<2x64x64xbf16, #tpu.memory_space<vmem>>, %arg9: memref<2x1x64xf32, #tpu.memory_space<vmem>>, %arg10: memref<2x64x256xbf16, #tpu.memory_space<vmem>>, %arg11: memref<2x128x64xbf16, #tpu.memory_space<vmem>>, %arg12: memref<1x64xf32, #tpu.memory_space<vmem>>, %arg13: memref<8x128xf32, #tpu.memory_space<vmem>>) attributes {dimension_semantics = [#tpu.dimension_semantics<arbitrary>], iteration_bounds = array<i64: 1>, scalar_prefetch = 0 : i64, scratch_operands = 0 : i64, tpu.core_type = #tpu.core_type<tc>, window_params = [{pipeline_mode = #tpu.pipeline_mode<synchronous>, transform_indices = @transform_0, window_bounds = array<i64: 16, 64>}, {pipeline_mode = #tpu.pipeline_mode<synchronous>, transform_indices = @transform_1, window_bounds = array<i64: 16, 128>}, {pipeline_mode = #tpu.pipeline_mode<synchronous>, transform_indices = @transform_2, window_bounds = array<i64: 16, 128>}, {pipeline_mode = #tpu.pipeline_mode<synchronous>, transform_indices = @transform_3, window_bounds = array<i64: 16, 64>}, {pipeline_mode = #tpu.pipeline_mode<synchronous>, transform_indices = @transform_4, window_bounds = array<i64: 64, 64>}, {pipeline_mode = #tpu.pipeline_mode<synchronous>, transform_indices = @transform_5, window_bounds = array<i64: 2, 1, 64>}, {pipeline_mode = #tpu.pipeline_mode<synchronous>, transform_indices = @transform_6, window_bounds = array<i64: 2, 64, 320>}, {pipeline_mode = #tpu.pipeline_mode<synchronous>, transform_indices = @transform_7, window_bounds = array<i64: 2, 64, 64>}, {pipeline_mode = #tpu.pipeline_mode<synchronous>, transform_indices = @transform_8, window_bounds = array<i64: 2, 1, 64>}, {pipeline_mode = #tpu.pipeline_mode<synchronous>, transform_indices = @transform_9, window_bounds = array<i64: 2, 64, 256>}, {pipeline_mode = #tpu.pipeline_mode<synchronous>, transform_indices = @transform_10, window_bounds = array<i64: 2, 128, 64>}, {pipeline_mode = #tpu.pipeline_mode<synchronous>, transform_indices = @transform_11, window_bounds = array<i64: 1, 64>}, {pipeline_mode = #tpu.pipeline_mode<synchronous>, transform_indices = @transform_12, window_bounds = array<i64: 8, 128>}]} {
    %c0 = arith.constant 0 : index
    %c0_0 = arith.constant 0 : index
    %0 = vector.load %arg1[%c0, %c0_0] : memref<16x64xf32, #tpu.memory_space<vmem>>, vector<16x64xf32>
    %c0_1 = arith.constant 0 : index
    %c0_2 = arith.constant 0 : index
    %1 = vector.load %arg2[%c0_1, %c0_2] : memref<16x128xf32, #tpu.memory_space<vmem>>, vector<16x128xf32>
    %c0_3 = arith.constant 0 : index
    %c0_4 = arith.constant 0 : index
    %2 = vector.load %arg3[%c0_3, %c0_4] : memref<16x128xf32, #tpu.memory_space<vmem>>, vector<16x128xf32>
    %c0_5 = arith.constant 0 : index
    %c0_6 = arith.constant 0 : index
    %3 = vector.load %arg4[%c0_5, %c0_6] : memref<16x64xf32, #tpu.memory_space<vmem>>, vector<16x64xf32>
    %c0_7 = arith.constant 0 : index
    %c0_8 = arith.constant 0 : index
    %4 = vector.load %arg5[%c0_7, %c0_8] : memref<64x64xf32, #tpu.memory_space<vmem>>, vector<64x64xf32>
    %c0_9 = arith.constant 0 : index
    %c0_10 = arith.constant 0 : index
    %c0_11 = arith.constant 0 : index
    %5 = vector.load %arg6[%c0_9, %c0_10, %c0_11] : memref<2x1x64xf32, #tpu.memory_space<vmem>>, vector<1x1x64xf32>
    %6 = vector.shape_cast %5 : vector<1x1x64xf32> to vector<1x64xf32>
    %7 = arith.mulf %0, %0 : vector<16x64xf32>
    %cst = arith.constant dense<0.000000e+00> : vector<16xf32>
    %8 = vector.multi_reduction <add>, %7, %cst [1] : vector<16x64xf32> to vector<16xf32>
    %9 = vector.shape_cast %8 : vector<16xf32> to vector<16x1xf32>
    %cst_12 = arith.constant 6.400000e+01 : f32
    %10 = vector.broadcast %cst_12 : f32 to vector<16x1xf32>
    %11 = arith.divf %9, %10 : vector<16x1xf32>
    %cst_13 = arith.constant 9.99999997E-7 : f32
    %12 = vector.broadcast %cst_13 : f32 to vector<16x1xf32>
    %13 = arith.addf %11, %12 : vector<16x1xf32>
    %14 = math.rsqrt %13 : vector<16x1xf32>
    %15 = vector.broadcast %14 : vector<16x1xf32> to vector<16x64xf32>
    %16 = arith.mulf %0, %15 : vector<16x64xf32>
    %17 = vector.broadcast %6 : vector<1x64xf32> to vector<16x64xf32>
    %18 = arith.mulf %16, %17 : vector<16x64xf32>
    %19 = arith.truncf %18 : vector<16x64xf32> to vector<16x64xbf16>
    %c0_14 = arith.constant 0 : index
    %c0_15 = arith.constant 0 : index
    %c0_16 = arith.constant 0 : index
    %20 = vector.load %arg7[%c0_14, %c0_15, %c0_16] : memref<2x64x320xbf16, #tpu.memory_space<vmem>>, vector<1x64x320xbf16>
    %21 = vector.shape_cast %20 : vector<1x64x320xbf16> to vector<64x320xbf16>
    %cst_17 = arith.constant dense<0.000000e+00> : vector<16x320xf32>
    %22 = tpu.matmul %19, %21, %cst_17 {dimension_numbers = #tpu.dot_dimension_numbers<[1], [0], [0], [1], [0, 0, 1, 1], [], []>} : vector<16x64xbf16>, vector<64x320xbf16>, vector<16x320xf32> -> vector<16x320xf32>
    %23 = vector.extract_strided_slice %22 {offsets = [0, 0], sizes = [16, 128], strides = [1, 1]} : vector<16x320xf32> to vector<16x128xf32>
    %24 = arith.mulf %23, %1 : vector<16x128xf32>
    %25 = vector.extract_strided_slice %22 {offsets = [0, 128], sizes = [16, 128], strides = [1, 1]} : vector<16x320xf32> to vector<16x128xf32>
    %26 = arith.mulf %25, %2 : vector<16x128xf32>
    %27 = arith.addf %24, %26 : vector<16x128xf32>
    %28 = vector.extract_strided_slice %27 {offsets = [0, 0], sizes = [16, 64], strides = [1, 1]} : vector<16x128xf32> to vector<16x64xf32>
    %29 = vector.extract_strided_slice %27 {offsets = [0, 64], sizes = [16, 64], strides = [1, 1]} : vector<16x128xf32> to vector<16x64xf32>
    %30 = vector.extract_strided_slice %22 {offsets = [0, 256], sizes = [16, 64], strides = [1, 1]} : vector<16x320xf32> to vector<16x64xf32>
    %31 = tpu.concatenate %29, %29, %29, %29 in 0 : vector<16x64xf32>, vector<16x64xf32>, vector<16x64xf32>, vector<16x64xf32> -> vector<64x64xf32>
    %32 = arith.mulf %31, %4 : vector<64x64xf32>
    %33 = arith.truncf %32 : vector<64x64xf32> to vector<64x64xbf16>
    %34 = tpu.concatenate %30, %30, %30, %30 in 0 : vector<16x64xf32>, vector<16x64xf32>, vector<16x64xf32>, vector<16x64xf32> -> vector<64x64xf32>
    %35 = arith.mulf %34, %4 : vector<64x64xf32>
    %36 = arith.truncf %35 : vector<64x64xf32> to vector<64x64xbf16>
    %37 = arith.truncf %28 : vector<16x64xf32> to vector<16x64xbf16>
    %cst_18 = arith.constant dense<0.000000e+00> : vector<16x64xf32>
    %38 = tpu.matmul %37, %33, %cst_18 {dimension_numbers = #tpu.dot_dimension_numbers<[1], [1], [0], [0], [0, 0, 1, 0], [], []>} : vector<16x64xbf16>, vector<64x64xbf16>, vector<16x64xf32> -> vector<16x64xf32>
    %39 = arith.addf %38, %3 : vector<16x64xf32>
    %cst_19 = arith.constant dense<0xFF800000> : vector<16xf32>
    %40 = vector.multi_reduction <maximumf>, %39, %cst_19 [1] : vector<16x64xf32> to vector<16xf32>
    %41 = vector.shape_cast %40 : vector<16xf32> to vector<16x1xf32>
    %42 = vector.broadcast %41 : vector<16x1xf32> to vector<16x64xf32>
    %43 = arith.subf %39, %42 : vector<16x64xf32>
    %44 = math.exp %43 : vector<16x64xf32>
    %cst_20 = arith.constant dense<0.000000e+00> : vector<16x64xf32>
    %45 = tpu.matmul %44, %4, %cst_20 {dimension_numbers = #tpu.dot_dimension_numbers<[1], [0], [0], [1], [0, 0, 1, 1], [], []>} : vector<16x64xf32>, vector<64x64xf32>, vector<16x64xf32> -> vector<16x64xf32>
    %46 = arith.truncf %44 : vector<16x64xf32> to vector<16x64xbf16>
    %cst_21 = arith.constant dense<0.000000e+00> : vector<16x64xf32>
    %47 = tpu.matmul %46, %36, %cst_21 {dimension_numbers = #tpu.dot_dimension_numbers<[1], [0], [0], [1], [0, 0, 1, 1], [], []>} : vector<16x64xbf16>, vector<64x64xbf16>, vector<16x64xf32> -> vector<16x64xf32>
    %48 = tpu.reciprocal %45 {approx = true} : vector<16x64xf32> -> vector<16x64xf32>
    %49 = arith.mulf %47, %48 : vector<16x64xf32>
    %50 = arith.truncf %49 : vector<16x64xf32> to vector<16x64xbf16>
    %c0_22 = arith.constant 0 : index
    %c0_23 = arith.constant 0 : index
    %c0_24 = arith.constant 0 : index
    %51 = vector.load %arg8[%c0_22, %c0_23, %c0_24] : memref<2x64x64xbf16, #tpu.memory_space<vmem>>, vector<1x64x64xbf16>
    %52 = vector.shape_cast %51 : vector<1x64x64xbf16> to vector<64x64xbf16>
    %cst_25 = arith.constant dense<0.000000e+00> : vector<16x64xf32>
    %53 = tpu.matmul %50, %52, %cst_25 {dimension_numbers = #tpu.dot_dimension_numbers<[1], [0], [0], [1], [0, 0, 1, 1], [], []>} : vector<16x64xbf16>, vector<64x64xbf16>, vector<16x64xf32> -> vector<16x64xf32>
    %54 = arith.addf %0, %53 : vector<16x64xf32>
    %c0_26 = arith.constant 0 : index
    %c0_27 = arith.constant 0 : index
    %c0_28 = arith.constant 0 : index
    %55 = vector.load %arg9[%c0_26, %c0_27, %c0_28] : memref<2x1x64xf32, #tpu.memory_space<vmem>>, vector<1x1x64xf32>
    %56 = vector.shape_cast %55 : vector<1x1x64xf32> to vector<1x64xf32>
    %57 = arith.mulf %54, %54 : vector<16x64xf32>
    %cst_29 = arith.constant dense<0.000000e+00> : vector<16xf32>
    %58 = vector.multi_reduction <add>, %57, %cst_29 [1] : vector<16x64xf32> to vector<16xf32>
    %59 = vector.shape_cast %58 : vector<16xf32> to vector<16x1xf32>
    %cst_30 = arith.constant 6.400000e+01 : f32
    %60 = vector.broadcast %cst_30 : f32 to vector<16x1xf32>
    %61 = arith.divf %59, %60 : vector<16x1xf32>
    %cst_31 = arith.constant 9.99999997E-7 : f32
    %62 = vector.broadcast %cst_31 : f32 to vector<16x1xf32>
    %63 = arith.addf %61, %62 : vector<16x1xf32>
    %64 = math.rsqrt %63 : vector<16x1xf32>
    %65 = vector.broadcast %64 : vector<16x1xf32> to vector<16x64xf32>
    %66 = arith.mulf %54, %65 : vector<16x64xf32>
    %67 = vector.broadcast %56 : vector<1x64xf32> to vector<16x64xf32>
    %68 = arith.mulf %66, %67 : vector<16x64xf32>
    %69 = arith.truncf %68 : vector<16x64xf32> to vector<16x64xbf16>
    %c0_32 = arith.constant 0 : index
    %c0_33 = arith.constant 0 : index
    %c0_34 = arith.constant 0 : index
    %70 = vector.load %arg10[%c0_32, %c0_33, %c0_34] : memref<2x64x256xbf16, #tpu.memory_space<vmem>>, vector<1x64x256xbf16>
    %71 = vector.shape_cast %70 : vector<1x64x256xbf16> to vector<64x256xbf16>
    %cst_35 = arith.constant dense<0.000000e+00> : vector<16x256xf32>
    %72 = tpu.matmul %69, %71, %cst_35 {dimension_numbers = #tpu.dot_dimension_numbers<[1], [0], [0], [1], [0, 0, 1, 1], [], []>} : vector<16x64xbf16>, vector<64x256xbf16>, vector<16x256xf32> -> vector<16x256xf32>
    %73 = vector.extract_strided_slice %72 {offsets = [0, 0], sizes = [16, 128], strides = [1, 1]} : vector<16x256xf32> to vector<16x128xf32>
    %74 = vector.extract_strided_slice %72 {offsets = [0, 128], sizes = [16, 128], strides = [1, 1]} : vector<16x256xf32> to vector<16x128xf32>
    %75 = arith.negf %73 : vector<16x128xf32>
    %76 = math.exp %75 : vector<16x128xf32>
    %cst_36 = arith.constant 1.000000e+00 : f32
    %77 = vector.broadcast %cst_36 : f32 to vector<16x128xf32>
    %78 = arith.addf %77, %76 : vector<16x128xf32>
    %79 = arith.divf %77, %78 : vector<16x128xf32>
    %80 = arith.mulf %73, %79 : vector<16x128xf32>
    %81 = arith.mulf %80, %74 : vector<16x128xf32>
    %82 = arith.truncf %81 : vector<16x128xf32> to vector<16x128xbf16>
    %c0_37 = arith.constant 0 : index
    %c0_38 = arith.constant 0 : index
    %c0_39 = arith.constant 0 : index
    %83 = vector.load %arg11[%c0_37, %c0_38, %c0_39] : memref<2x128x64xbf16, #tpu.memory_space<vmem>>, vector<1x128x64xbf16>
    %84 = vector.shape_cast %83 : vector<1x128x64xbf16> to vector<128x64xbf16>
    %cst_40 = arith.constant dense<0.000000e+00> : vector<16x64xf32>
    %85 = tpu.matmul %82, %84, %cst_40 {dimension_numbers = #tpu.dot_dimension_numbers<[1], [0], [0], [1], [0, 0, 1, 1], [], []>} : vector<16x128xbf16>, vector<128x64xbf16>, vector<16x64xf32> -> vector<16x64xf32>
    %86 = arith.addf %54, %85 : vector<16x64xf32>
    %c1 = arith.constant 1 : index
    %c0_41 = arith.constant 0 : index
    %c0_42 = arith.constant 0 : index
    %87 = vector.load %arg6[%c1, %c0_41, %c0_42] : memref<2x1x64xf32, #tpu.memory_space<vmem>>, vector<1x1x64xf32>
    %88 = vector.shape_cast %87 : vector<1x1x64xf32> to vector<1x64xf32>
    %89 = arith.mulf %86, %86 : vector<16x64xf32>
    %cst_43 = arith.constant dense<0.000000e+00> : vector<16xf32>
    %90 = vector.multi_reduction <add>, %89, %cst_43 [1] : vector<16x64xf32> to vector<16xf32>
    %91 = vector.shape_cast %90 : vector<16xf32> to vector<16x1xf32>
    %cst_44 = arith.constant 6.400000e+01 : f32
    %92 = vector.broadcast %cst_44 : f32 to vector<16x1xf32>
    %93 = arith.divf %91, %92 : vector<16x1xf32>
    %cst_45 = arith.constant 9.99999997E-7 : f32
    %94 = vector.broadcast %cst_45 : f32 to vector<16x1xf32>
    %95 = arith.addf %93, %94 : vector<16x1xf32>
    %96 = math.rsqrt %95 : vector<16x1xf32>
    %97 = vector.broadcast %96 : vector<16x1xf32> to vector<16x64xf32>
    %98 = arith.mulf %86, %97 : vector<16x64xf32>
    %99 = vector.broadcast %88 : vector<1x64xf32> to vector<16x64xf32>
    %100 = arith.mulf %98, %99 : vector<16x64xf32>
    %101 = arith.truncf %100 : vector<16x64xf32> to vector<16x64xbf16>
    %c1_46 = arith.constant 1 : index
    %c0_47 = arith.constant 0 : index
    %c0_48 = arith.constant 0 : index
    %102 = vector.load %arg7[%c1_46, %c0_47, %c0_48] : memref<2x64x320xbf16, #tpu.memory_space<vmem>>, vector<1x64x320xbf16>
    %103 = vector.shape_cast %102 : vector<1x64x320xbf16> to vector<64x320xbf16>
    %cst_49 = arith.constant dense<0.000000e+00> : vector<16x320xf32>
    %104 = tpu.matmul %101, %103, %cst_49 {dimension_numbers = #tpu.dot_dimension_numbers<[1], [0], [0], [1], [0, 0, 1, 1], [], []>} : vector<16x64xbf16>, vector<64x320xbf16>, vector<16x320xf32> -> vector<16x320xf32>
    %105 = vector.extract_strided_slice %104 {offsets = [0, 0], sizes = [16, 128], strides = [1, 1]} : vector<16x320xf32> to vector<16x128xf32>
    %106 = arith.mulf %105, %1 : vector<16x128xf32>
    %107 = vector.extract_strided_slice %104 {offsets = [0, 128], sizes = [16, 128], strides = [1, 1]} : vector<16x320xf32> to vector<16x128xf32>
    %108 = arith.mulf %107, %2 : vector<16x128xf32>
    %109 = arith.addf %106, %108 : vector<16x128xf32>
    %110 = vector.extract_strided_slice %109 {offsets = [0, 0], sizes = [16, 64], strides = [1, 1]} : vector<16x128xf32> to vector<16x64xf32>
    %111 = vector.extract_strided_slice %109 {offsets = [0, 64], sizes = [16, 64], strides = [1, 1]} : vector<16x128xf32> to vector<16x64xf32>
    %112 = vector.extract_strided_slice %104 {offsets = [0, 256], sizes = [16, 64], strides = [1, 1]} : vector<16x320xf32> to vector<16x64xf32>
    %113 = tpu.concatenate %111, %111, %111, %111 in 0 : vector<16x64xf32>, vector<16x64xf32>, vector<16x64xf32>, vector<16x64xf32> -> vector<64x64xf32>
    %114 = arith.mulf %113, %4 : vector<64x64xf32>
    %115 = arith.truncf %114 : vector<64x64xf32> to vector<64x64xbf16>
    %116 = tpu.concatenate %112, %112, %112, %112 in 0 : vector<16x64xf32>, vector<16x64xf32>, vector<16x64xf32>, vector<16x64xf32> -> vector<64x64xf32>
    %117 = arith.mulf %116, %4 : vector<64x64xf32>
    %118 = arith.truncf %117 : vector<64x64xf32> to vector<64x64xbf16>
    %119 = arith.truncf %110 : vector<16x64xf32> to vector<16x64xbf16>
    %cst_50 = arith.constant dense<0.000000e+00> : vector<16x64xf32>
    %120 = tpu.matmul %119, %115, %cst_50 {dimension_numbers = #tpu.dot_dimension_numbers<[1], [1], [0], [0], [0, 0, 1, 0], [], []>} : vector<16x64xbf16>, vector<64x64xbf16>, vector<16x64xf32> -> vector<16x64xf32>
    %121 = arith.addf %120, %3 : vector<16x64xf32>
    %cst_51 = arith.constant dense<0xFF800000> : vector<16xf32>
    %122 = vector.multi_reduction <maximumf>, %121, %cst_51 [1] : vector<16x64xf32> to vector<16xf32>
    %123 = vector.shape_cast %122 : vector<16xf32> to vector<16x1xf32>
    %124 = vector.broadcast %123 : vector<16x1xf32> to vector<16x64xf32>
    %125 = arith.subf %121, %124 : vector<16x64xf32>
    %126 = math.exp %125 : vector<16x64xf32>
    %cst_52 = arith.constant dense<0.000000e+00> : vector<16x64xf32>
    %127 = tpu.matmul %126, %4, %cst_52 {dimension_numbers = #tpu.dot_dimension_numbers<[1], [0], [0], [1], [0, 0, 1, 1], [], []>} : vector<16x64xf32>, vector<64x64xf32>, vector<16x64xf32> -> vector<16x64xf32>
    %128 = arith.truncf %126 : vector<16x64xf32> to vector<16x64xbf16>
    %cst_53 = arith.constant dense<0.000000e+00> : vector<16x64xf32>
    %129 = tpu.matmul %128, %118, %cst_53 {dimension_numbers = #tpu.dot_dimension_numbers<[1], [0], [0], [1], [0, 0, 1, 1], [], []>} : vector<16x64xbf16>, vector<64x64xbf16>, vector<16x64xf32> -> vector<16x64xf32>
    %130 = tpu.reciprocal %127 {approx = true} : vector<16x64xf32> -> vector<16x64xf32>
    %131 = arith.mulf %129, %130 : vector<16x64xf32>
    %132 = arith.truncf %131 : vector<16x64xf32> to vector<16x64xbf16>
    %c1_54 = arith.constant 1 : index
    %c0_55 = arith.constant 0 : index
    %c0_56 = arith.constant 0 : index
    %133 = vector.load %arg8[%c1_54, %c0_55, %c0_56] : memref<2x64x64xbf16, #tpu.memory_space<vmem>>, vector<1x64x64xbf16>
    %134 = vector.shape_cast %133 : vector<1x64x64xbf16> to vector<64x64xbf16>
    %cst_57 = arith.constant dense<0.000000e+00> : vector<16x64xf32>
    %135 = tpu.matmul %132, %134, %cst_57 {dimension_numbers = #tpu.dot_dimension_numbers<[1], [0], [0], [1], [0, 0, 1, 1], [], []>} : vector<16x64xbf16>, vector<64x64xbf16>, vector<16x64xf32> -> vector<16x64xf32>
    %136 = arith.addf %86, %135 : vector<16x64xf32>
    %c1_58 = arith.constant 1 : index
    %c0_59 = arith.constant 0 : index
    %c0_60 = arith.constant 0 : index
    %137 = vector.load %arg9[%c1_58, %c0_59, %c0_60] : memref<2x1x64xf32, #tpu.memory_space<vmem>>, vector<1x1x64xf32>
    %138 = vector.shape_cast %137 : vector<1x1x64xf32> to vector<1x64xf32>
    %139 = arith.mulf %136, %136 : vector<16x64xf32>
    %cst_61 = arith.constant dense<0.000000e+00> : vector<16xf32>
    %140 = vector.multi_reduction <add>, %139, %cst_61 [1] : vector<16x64xf32> to vector<16xf32>
    %141 = vector.shape_cast %140 : vector<16xf32> to vector<16x1xf32>
    %cst_62 = arith.constant 6.400000e+01 : f32
    %142 = vector.broadcast %cst_62 : f32 to vector<16x1xf32>
    %143 = arith.divf %141, %142 : vector<16x1xf32>
    %cst_63 = arith.constant 9.99999997E-7 : f32
    %144 = vector.broadcast %cst_63 : f32 to vector<16x1xf32>
    %145 = arith.addf %143, %144 : vector<16x1xf32>
    %146 = math.rsqrt %145 : vector<16x1xf32>
    %147 = vector.broadcast %146 : vector<16x1xf32> to vector<16x64xf32>
    %148 = arith.mulf %136, %147 : vector<16x64xf32>
    %149 = vector.broadcast %138 : vector<1x64xf32> to vector<16x64xf32>
    %150 = arith.mulf %148, %149 : vector<16x64xf32>
    %151 = arith.truncf %150 : vector<16x64xf32> to vector<16x64xbf16>
    %c1_64 = arith.constant 1 : index
    %c0_65 = arith.constant 0 : index
    %c0_66 = arith.constant 0 : index
    %152 = vector.load %arg10[%c1_64, %c0_65, %c0_66] : memref<2x64x256xbf16, #tpu.memory_space<vmem>>, vector<1x64x256xbf16>
    %153 = vector.shape_cast %152 : vector<1x64x256xbf16> to vector<64x256xbf16>
    %cst_67 = arith.constant dense<0.000000e+00> : vector<16x256xf32>
    %154 = tpu.matmul %151, %153, %cst_67 {dimension_numbers = #tpu.dot_dimension_numbers<[1], [0], [0], [1], [0, 0, 1, 1], [], []>} : vector<16x64xbf16>, vector<64x256xbf16>, vector<16x256xf32> -> vector<16x256xf32>
    %155 = vector.extract_strided_slice %154 {offsets = [0, 0], sizes = [16, 128], strides = [1, 1]} : vector<16x256xf32> to vector<16x128xf32>
    %156 = vector.extract_strided_slice %154 {offsets = [0, 128], sizes = [16, 128], strides = [1, 1]} : vector<16x256xf32> to vector<16x128xf32>
    %157 = arith.negf %155 : vector<16x128xf32>
    %158 = math.exp %157 : vector<16x128xf32>
    %cst_68 = arith.constant 1.000000e+00 : f32
    %159 = vector.broadcast %cst_68 : f32 to vector<16x128xf32>
    %160 = arith.addf %159, %158 : vector<16x128xf32>
    %161 = arith.divf %159, %160 : vector<16x128xf32>
    %162 = arith.mulf %155, %161 : vector<16x128xf32>
    %163 = arith.mulf %162, %156 : vector<16x128xf32>
    %164 = arith.truncf %163 : vector<16x128xf32> to vector<16x128xbf16>
    %c1_69 = arith.constant 1 : index
    %c0_70 = arith.constant 0 : index
    %c0_71 = arith.constant 0 : index
    %165 = vector.load %arg11[%c1_69, %c0_70, %c0_71] : memref<2x128x64xbf16, #tpu.memory_space<vmem>>, vector<1x128x64xbf16>
    %166 = vector.shape_cast %165 : vector<1x128x64xbf16> to vector<128x64xbf16>
    %cst_72 = arith.constant dense<0.000000e+00> : vector<16x64xf32>
    %167 = tpu.matmul %164, %166, %cst_72 {dimension_numbers = #tpu.dot_dimension_numbers<[1], [0], [0], [1], [0, 0, 1, 1], [], []>} : vector<16x128xbf16>, vector<128x64xbf16>, vector<16x64xf32> -> vector<16x64xf32>
    %168 = arith.addf %136, %167 : vector<16x64xf32>
    %c0_73 = arith.constant 0 : index
    %c0_74 = arith.constant 0 : index
    %169 = vector.load %arg12[%c0_73, %c0_74] : memref<1x64xf32, #tpu.memory_space<vmem>>, vector<1x64xf32>
    %170 = arith.mulf %168, %168 : vector<16x64xf32>
    %cst_75 = arith.constant dense<0.000000e+00> : vector<16xf32>
    %171 = vector.multi_reduction <add>, %170, %cst_75 [1] : vector<16x64xf32> to vector<16xf32>
    %172 = vector.shape_cast %171 : vector<16xf32> to vector<16x1xf32>
    %cst_76 = arith.constant 6.400000e+01 : f32
    %173 = vector.broadcast %cst_76 : f32 to vector<16x1xf32>
    %174 = arith.divf %172, %173 : vector<16x1xf32>
    %cst_77 = arith.constant 9.99999997E-7 : f32
    %175 = vector.broadcast %cst_77 : f32 to vector<16x1xf32>
    %176 = arith.addf %174, %175 : vector<16x1xf32>
    %177 = math.rsqrt %176 : vector<16x1xf32>
    %178 = vector.broadcast %177 : vector<16x1xf32> to vector<16x64xf32>
    %179 = arith.mulf %168, %178 : vector<16x64xf32>
    %180 = vector.broadcast %169 : vector<1x64xf32> to vector<16x64xf32>
    %181 = arith.mulf %179, %180 : vector<16x64xf32>
    %182 = vector.extract_strided_slice %181 {offsets = [0, 0], sizes = [8, 64], strides = [1, 1]} : vector<16x64xf32> to vector<8x64xf32>
    %183 = vector.extract_strided_slice %181 {offsets = [8, 0], sizes = [8, 64], strides = [1, 1]} : vector<16x64xf32> to vector<8x64xf32>
    %184 = tpu.concatenate %182, %183 in 1 : vector<8x64xf32>, vector<8x64xf32> -> vector<8x128xf32>
    %c0_78 = arith.constant 0 : index
    %c0_79 = arith.constant 0 : index
    %185 = vector.load %arg13[%c0_78, %c0_79] : memref<8x128xf32, #tpu.memory_space<vmem>>, vector<8x128xf32>
    tpu.vector_store %arg13[%c0_78, %c0_79], %184 {strides = array<i32>} : memref<8x128xf32, #tpu.memory_space<vmem>>, vector<8x128xf32>,
    return
  }
  func.func @transform_0(%arg0: i32) -> (i32, i32) {
    %c0_i32 = arith.constant 0 : i32
    %c0_i32_0 = arith.constant 0 : i32
    %c0_i32_1 = arith.constant 0 : i32
    return %c0_i32, %c0_i32_0 : i32, i32
  }
  func.func @transform_1(%arg0: i32) -> (i32, i32) {
    %c0_i32 = arith.constant 0 : i32
    %c0_i32_0 = arith.constant 0 : i32
    %c0_i32_1 = arith.constant 0 : i32
    return %c0_i32, %c0_i32_0 : i32, i32
  }
  func.func @transform_2(%arg0: i32) -> (i32, i32) {
    %c0_i32 = arith.constant 0 : i32
    %c0_i32_0 = arith.constant 0 : i32
    %c0_i32_1 = arith.constant 0 : i32
    return %c0_i32, %c0_i32_0 : i32, i32
  }
  func.func @transform_3(%arg0: i32) -> (i32, i32) {
    %c0_i32 = arith.constant 0 : i32
    %c0_i32_0 = arith.constant 0 : i32
    %c0_i32_1 = arith.constant 0 : i32
    return %c0_i32, %c0_i32_0 : i32, i32
  }
  func.func @transform_4(%arg0: i32) -> (i32, i32) {
    %c0_i32 = arith.constant 0 : i32
    %c0_i32_0 = arith.constant 0 : i32
    %c0_i32_1 = arith.constant 0 : i32
    return %c0_i32, %c0_i32_0 : i32, i32
  }
  func.func @transform_5(%arg0: i32) -> (i32, i32, i32) {
    %c0_i32 = arith.constant 0 : i32
    %c0_i32_0 = arith.constant 0 : i32
    %c0_i32_1 = arith.constant 0 : i32
    %c0_i32_2 = arith.constant 0 : i32
    return %c0_i32, %c0_i32_0, %c0_i32_1 : i32, i32, i32
  }
  func.func @transform_6(%arg0: i32) -> (i32, i32, i32) {
    %c0_i32 = arith.constant 0 : i32
    %c0_i32_0 = arith.constant 0 : i32
    %c0_i32_1 = arith.constant 0 : i32
    %c0_i32_2 = arith.constant 0 : i32
    return %c0_i32, %c0_i32_0, %c0_i32_1 : i32, i32, i32
  }
  func.func @transform_7(%arg0: i32) -> (i32, i32, i32) {
    %c0_i32 = arith.constant 0 : i32
    %c0_i32_0 = arith.constant 0 : i32
    %c0_i32_1 = arith.constant 0 : i32
    %c0_i32_2 = arith.constant 0 : i32
    return %c0_i32, %c0_i32_0, %c0_i32_1 : i32, i32, i32
  }
  func.func @transform_8(%arg0: i32) -> (i32, i32, i32) {
    %c0_i32 = arith.constant 0 : i32
    %c0_i32_0 = arith.constant 0 : i32
    %c0_i32_1 = arith.constant 0 : i32
    %c0_i32_2 = arith.constant 0 : i32
    return %c0_i32, %c0_i32_0, %c0_i32_1 : i32, i32, i32
  }
  func.func @transform_9(%arg0: i32) -> (i32, i32, i32) {
    %c0_i32 = arith.constant 0 : i32
    %c0_i32_0 = arith.constant 0 : i32
    %c0_i32_1 = arith.constant 0 : i32
    %c0_i32_2 = arith.constant 0 : i32
    return %c0_i32, %c0_i32_0, %c0_i32_1 : i32, i32, i32
  }
  func.func @transform_10(%arg0: i32) -> (i32, i32, i32) {
    %c0_i32 = arith.constant 0 : i32
    %c0_i32_0 = arith.constant 0 : i32
    %c0_i32_1 = arith.constant 0 : i32
    %c0_i32_2 = arith.constant 0 : i32
    return %c0_i32, %c0_i32_0, %c0_i32_1 : i32, i32, i32
  }
  func.func @transform_11(%arg0: i32) -> (i32, i32) {
    %c0_i32 = arith.constant 0 : i32
    %c0_i32_0 = arith.constant 0 : i32
    %c0_i32_1 = arith.constant 0 : i32
    return %c0_i32, %c0_i32_0 : i32, i32
  }
  func.func @transform_12(%arg0: i32) -> (i32, i32) {
    %c0_i32 = arith.constant 0 : i32
    %c0_i32_0 = arith.constant 0 : i32
    %c0_i32_1 = arith.constant 0 : i32
    return %c0_i32, %c0_i32_0 : i32, i32
  }
}

</mosaic_0001>

<llo_original>
// kernel: tile.29
$region0: #{tile.29}
  %s0 = inlined_call_operand.vmem [shape: f32[16,4,16], index: 0, kind: input, shape index: {}]
  %s1 = inlined_call_operand.vmem [shape: f32[16,64], index: 1, kind: output, shape index: {}]
  $region1: #{tile.29} parent=0
    #allocation0 [shape = 'u8[65536]{0}', space=vmem, size = 0x10000, scoped, tag = 'scoped mem for input reshape']
    %s3 = sshllo.u32 0, 4
    %s4 = smul.addr 4, 15
    %s5 = scalar_lea.vmem %s0, %s4
    %v6 = vld [vmem:[%s5] sm:%s3]
    %s7 = scalar_lea.vmem [#allocation0], 120
    %8 = vst [vmem:[%s7] sm:%s3] %v6
    %s9 = smul.addr 4, 14
    %s10 = scalar_lea.vmem %s0, %s9
    %v11 = vld [vmem:[%s10] sm:%s3]
    %s12 = scalar_lea.vmem [#allocation0], 112
    %13 = vst [vmem:[%s12] sm:%s3] %v11
    %s14 = smul.addr 4, 13
    %s15 = scalar_lea.vmem %s0, %s14
    %v16 = vld [vmem:[%s15] sm:%s3]
    %s17 = scalar_lea.vmem [#allocation0], 104
    %18 = vst [vmem:[%s17] sm:%s3] %v16
    %s19 = smul.addr 4, 12
    %s20 = scalar_lea.vmem %s0, %s19
    %v21 = vld [vmem:[%s20] sm:%s3]
    %s22 = scalar_lea.vmem [#allocation0], 96
    %23 = vst [vmem:[%s22] sm:%s3] %v21
    %s24 = smul.addr 4, 11
    %s25 = scalar_lea.vmem %s0, %s24
    %v26 = vld [vmem:[%s25] sm:%s3]
    %s27 = scalar_lea.vmem [#allocation0], 88
    %28 = vst [vmem:[%s27] sm:%s3] %v26
    %s29 = smul.addr 4, 10
    %s30 = scalar_lea.vmem %s0, %s29
    %v31 = vld [vmem:[%s30] sm:%s3]
    %s32 = scalar_lea.vmem [#allocation0], 80
    %33 = vst [vmem:[%s32] sm:%s3] %v31
    %s34 = smul.addr 4, 9
    %s35 = scalar_lea.vmem %s0, %s34
    %v36 = vld [vmem:[%s35] sm:%s3]
    %s37 = scalar_lea.vmem [#allocation0], 72
    %38 = vst [vmem:[%s37] sm:%s3] %v36
    %s39 = smul.addr 4, 8
    %s40 = scalar_lea.vmem %s0, %s39
    %v41 = vld [vmem:[%s40] sm:%s3]
    %s42 = scalar_lea.vmem [#allocation0], 64
    %43 = vst [vmem:[%s42] sm:%s3] %v41
    %s44 = smul.addr 4, 7
    %s45 = scalar_lea.vmem %s0, %s44
    %v46 = vld [vmem:[%s45] sm:%s3]
    %s47 = scalar_lea.vmem [#allocation0], 56
    %48 = vst [vmem:[%s47] sm:%s3] %v46
    %s49 = smul.addr 4, 6
    %s50 = scalar_lea.vmem %s0, %s49
    %v51 = vld [vmem:[%s50] sm:%s3]
    %s52 = scalar_lea.vmem [#allocation0], 48
    %53 = vst [vmem:[%s52] sm:%s3] %v51
    %s54 = smul.addr 4, 5
    %s55 = scalar_lea.vmem %s0, %s54
    %v56 = vld [vmem:[%s55] sm:%s3]
    %s57 = scalar_lea.vmem [#allocation0], 40
    %58 = vst [vmem:[%s57] sm:%s3] %v56
    %s59 = smul.addr 4, 4
    %s60 = scalar_lea.vmem %s0, %s59
    %v61 = vld [vmem:[%s60] sm:%s3]
    %s62 = scalar_lea.vmem [#allocation0], 32
    %63 = vst [vmem:[%s62] sm:%s3] %v61
    %s64 = smul.addr 4, 3
    %s65 = scalar_lea.vmem %s0, %s64
    %v66 = vld [vmem:[%s65] sm:%s3]
    %s67 = scalar_lea.vmem [#allocation0], 24
    %68 = vst [vmem:[%s67] sm:%s3] %v66
    %s69 = smul.addr 4, 2
    %s70 = scalar_lea.vmem %s0, %s69
    %v71 = vld [vmem:[%s70] sm:%s3]
    %s72 = scalar_lea.vmem [#allocation0], 16
    %73 = vst [vmem:[%s72] sm:%s3] %v71
    %s74 = scalar_lea.vmem %s0, 4
    %v75 = vld [vmem:[%s74] sm:%s3]
    %s76 = scalar_lea.vmem [#allocation0], 8
    %77 = vst [vmem:[%s76] sm:%s3] %v75
    %v78 = vld [vmem:[%s0] sm:%s3]
    %79 = vst [vmem:[#allocation0] sm:%s3] %v78
    %v80 = vld [vmem:[#allocation0] ss:$8 sm:$0xf]
    %v81 = vld [vmem:[#allocation0] ss:$8 sm:$0xf0]
    %vm82 = vcmask 1047556
    %v83 = vsel %vm82, %v81, %v80
    %vm84 = vcmask 130048
    %85 = vst.msk [vmem:[%s1] sm:$0xff] %vm84, %v83
    %s86 = scalar_lea.vmem [#allocation0], 64
    %v87 = vld [vmem:[%s86] ss:$8 sm:$0xf]
    %s88 = scalar_lea.vmem [#allocation0], 64
    %v89 = vld [vmem:[%s88] ss:$8 sm:$0xf0]
    %vm90 = vcmask 1047556
    %v91 = vsel %vm90, %v89, %v87
    %vm92 = vcmask 130048
    %s93 = scalar_lea.vmem %s1, 8
    %94 = vst.msk [vmem:[%s93] sm:$0xff] %vm92, %v91
    %s95 = scalar_lea.vmem [#allocation0], 3
    %v96 = vld [vmem:[%s95] ss:$8 sm:$0xf]
    %s97 = scalar_lea.vmem [#allocation0], 3
    %v98 = vld [vmem:[%s97] ss:$8 sm:$0xf0]
    %vm99 = vcmask 1047556
    %v100 = vsel %vm99, %v98, %v96
    %101 = vrot.lane.b32.xlu0 %v100, 48
    %v102 = vpop.permute.xlu0 %101
    %vm103 = vcmask 523648
    %104 = vst.msk [vmem:[%s1] sm:$0xff] %vm103, %v102
    %s105 = scalar_lea.vmem [#allocation0], 67
    %v106 = vld [vmem:[%s105] ss:$8 sm:$0xf]
    %s107 = scalar_lea.vmem [#allocation0], 67
    %v108 = vld [vmem:[%s107] ss:$8 sm:$0xf0]
    %vm109 = vcmask 1047556
    %v110 = vsel %vm109, %v108, %v106
    %111 = vrot.lane.b32.xlu0 %v110, 48
    %v112 = vpop.permute.xlu0 %111
    %vm113 = vcmask 523648
    %s114 = scalar_lea.vmem %s1, 8
    %115 = vst.msk [vmem:[%s114] sm:$0xff] %vm113, %v112
    %s116 = scalar_lea.vmem [#allocation0], 2
    %v117 = vld [vmem:[%s116] ss:$8 sm:$0xf]
    %s118 = scalar_lea.vmem [#allocation0], 2
    %v119 = vld [vmem:[%s118] ss:$8 sm:$0xf0]
    %vm120 = vcmask 1047556
    %v121 = vsel %vm120, %v119, %v117
    %122 = vrot.lane.b32.xlu0 %v121, 32
    %v123 = vpop.permute.xlu0 %122
    %vm124 = vcmask 392448
    %125 = vst.msk [vmem:[%s1] sm:$0xff] %vm124, %v123
    %s126 = scalar_lea.vmem [#allocation0], 66
    %v127 = vld [vmem:[%s126] ss:$8 sm:$0xf]
    %s128 = scalar_lea.vmem [#allocation0], 66
    %v129 = vld [vmem:[%s128] ss:$8 sm:$0xf0]
    %vm130 = vcmask 1047556
    %v131 = vsel %vm130, %v129, %v127
    %132 = vrot.lane.b32.xlu0 %v131, 32
    %v133 = vpop.permute.xlu0 %132
    %vm134 = vcmask 392448
    %s135 = scalar_lea.vmem %s1, 8
    %136 = vst.msk [vmem:[%s135] sm:$0xff] %vm134, %v133
    %s137 = scalar_lea.vmem [#allocation0], 1
    %v138 = vld [vmem:[%s137] ss:$8 sm:$0xf]
    %s139 = scalar_lea.vmem [#allocation0], 1
    %v140 = vld [vmem:[%s139] ss:$8 sm:$0xf0]
    %vm141 = vcmask 1047556
    %v142 = vsel %vm141, %v140, %v138
    %143 = vrot.lane.b32.xlu0 %v142, 16
    %v144 = vpop.permute.xlu0 %143
    %vm145 = vcmask 261248
    %146 = vst.msk [vmem:[%s1] sm:$0xff] %vm145, %v144
    %s147 = scalar_lea.vmem [#allocation0], 65
    %v148 = vld [vmem:[%s147] ss:$8 sm:$0xf]
    %s149 = scalar_lea.vmem [#allocation0], 65
    %v150 = vld [vmem:[%s149] ss:$8 sm:$0xf0]
    %vm151 = vcmask 1047556
    %v152 = vsel %vm151, %v150, %v148
    %153 = vrot.lane.b32.xlu0 %v152, 16
    %v154 = vpop.permute.xlu0 %153
    %vm155 = vcmask 261248
    %s156 = scalar_lea.vmem %s1, 8
    %157 = vst.msk [vmem:[%s156] sm:$0xff] %vm155, %v154

// kernel: tile.18
$region0: #{tile.18}
  #allocation0 [shape = 's32[1]{0}', space=sflag, size = 0x4, scoped, tag = 'scoped memory for tile.18']
  %s0 = inlined_call_operand.vmem [shape: f32[8,16], index: 0, kind: input, shape index: {}]
  %s1 = inlined_call_operand.vmem [shape: f32[2,8,8,16], index: 1, kind: output, shape index: {}]
  // Predicated region
  $region2: #{tile.18} parent=0 // pred_check
    _
  $region3: #{tile.18} parent=0 // pred_check_branch
    %3 = sbr.rel (0) target = $region5
  $region4: #{tile.18} parent=0 // pred_region
    _
  $region5: #{tile.18} parent=0 // pred_fallthru
    _
  %v4 = vld [vmem:[%s0] ss:$0 sm:$0xff]
  %5 = vst [vmem:[%s1] sm:$0xff] %v4
  %s6 = scalar_lea.vmem %s1, 64
  %7 = vst [vmem:[%s6] sm:$0xff] %v4
  %s8 = scalar_lea.vmem %s0, 1
  %v9 = vld [vmem:[%s8] ss:$0 sm:$0xff]
  %s10 = scalar_lea.vmem %s1, 8
  %11 = vst [vmem:[%s10] sm:$0xff] %v9
  %s12 = scalar_lea.vmem %s1, 72
  %13 = vst [vmem:[%s12] sm:$0xff] %v9
  %s14 = scalar_lea.vmem %s0, 2
  %v15 = vld [vmem:[%s14] ss:$0 sm:$0xff]
  %s16 = scalar_lea.vmem %s1, 16
  %17 = vst [vmem:[%s16] sm:$0xff] %v15
  %s18 = scalar_lea.vmem %s1, 80
  %19 = vst [vmem:[%s18] sm:$0xff] %v15
  %s20 = scalar_lea.vmem %s0, 3
  %v21 = vld [vmem:[%s20] ss:$0 sm:$0xff]
  %s22 = scalar_lea.vmem %s1, 24
  %23 = vst [vmem:[%s22] sm:$0xff] %v21
  %s24 = scalar_lea.vmem %s1, 88
  %25 = vst [vmem:[%s24] sm:$0xff] %v21
  %s26 = scalar_lea.vmem %s0, 4
  %v27 = vld [vmem:[%s26] ss:$0 sm:$0xff]
  %s28 = scalar_lea.vmem %s1, 32
  %29 = vst [vmem:[%s28] sm:$0xff] %v27
  %s30 = scalar_lea.vmem %s1, 96
  %31 = vst [vmem:[%s30] sm:$0xff] %v27
  %s32 = scalar_lea.vmem %s0, 5
  %v33 = vld [vmem:[%s32] ss:$0 sm:$0xff]
  %s34 = scalar_lea.vmem %s1, 40
  %35 = vst [vmem:[%s34] sm:$0xff] %v33
  %s36 = scalar_lea.vmem %s1, 104
  %37 = vst [vmem:[%s36] sm:$0xff] %v33
  %s38 = scalar_lea.vmem %s0, 6
  %v39 = vld [vmem:[%s38] ss:$0 sm:$0xff]
  %s40 = scalar_lea.vmem %s1, 48
  %41 = vst [vmem:[%s40] sm:$0xff] %v39
  %s42 = scalar_lea.vmem %s1, 112
  %43 = vst [vmem:[%s42] sm:$0xff] %v39
  %s44 = scalar_lea.vmem %s0, 7
  %v45 = vld [vmem:[%s44] ss:$0 sm:$0xff]
  %s46 = scalar_lea.vmem %s1, 56
  %47 = vst [vmem:[%s46] sm:$0xff] %v45
  %s48 = scalar_lea.vmem %s1, 120
  %49 = vst [vmem:[%s48] sm:$0xff] %v45

// kernel: tile.19
$region0: #{tile.19}
  %s0 = inlined_call_operand.vmem [shape: f32[2,8,8,16], index: 0, kind: input, shape index: {}]
  %s1 = inlined_call_operand.vmem [shape: f32[16,128], index: 1, kind: output, shape index: {}]
  %v2 = vld [vmem:[%s0] ss:$8 sm:$0xf]
  %v3 = vld [vmem:[%s0] ss:$8 sm:$0xf0]
  %vm4 = vcmask 1047556
  %v5 = vsel %vm4, %v3, %v2
  %vm6 = vcmask 130048
  %7 = vst.msk [vmem:[%s1] sm:$0xff] %vm6, %v5
  %s8 = scalar_lea.vmem %s0, 64
  %v9 = vld [vmem:[%s8] ss:$8 sm:$0xf]
  %s10 = scalar_lea.vmem %s0, 64
  %v11 = vld [vmem:[%s10] ss:$8 sm:$0xf0]
  %vm12 = vcmask 1047556
  %v13 = vsel %vm12, %v11, %v9
  %vm14 = vcmask 130048
  %s15 = scalar_lea.vmem %s1, 8
  %16 = vst.msk [vmem:[%s15] sm:$0xff] %vm14, %v13
  %s17 = scalar_lea.vmem %s0, 7
  %v18 = vld [vmem:[%s17] ss:$8 sm:$0xf]
  %s19 = scalar_lea.vmem %s0, 7
  %v20 = vld [vmem:[%s19] ss:$8 sm:$0xf0]
  %vm21 = vcmask 1047556
  %v22 = vsel %vm21, %v20, %v18
  %23 = vrot.lane.b32.xlu0 %v22, 112
  %v24 = vpop.permute.xlu0 %23
  %vm25 = vcmask 1048448
  %26 = vst.msk [vmem:[%s1] sm:$0xff] %vm25, %v24
  %s27 = scalar_lea.vmem %s0, 71
  %v28 = vld [vmem:[%s27] ss:$8 sm:$0xf]
  %s29 = scalar_lea.vmem %s0, 71
  %v30 = vld [vmem:[%s29] ss:$8 sm:$0xf0]
  %vm31 = vcmask 1047556
  %v32 = vsel %vm31, %v30, %v28
  %33 = vrot.lane.b32.xlu0 %v32, 112
  %v34 = vpop.permute.xlu0 %33
  %vm35 = vcmask 1048448
  %s36 = scalar_lea.vmem %s1, 8
  %37 = vst.msk [vmem:[%s36] sm:$0xff] %vm35, %v34
  %s38 = scalar_lea.vmem %s0, 6
  %v39 = vld [vmem:[%s38] ss:$8 sm:$0xf]
  %s40 = scalar_lea.vmem %s0, 6
  %v41 = vld [vmem:[%s40] ss:$8 sm:$0xf0]
  %vm42 = vcmask 1047556
  %v43 = vsel %vm42, %v41, %v39
  %44 = vrot.lane.b32.xlu0 %v43, 96
  %v45 = vpop.permute.xlu0 %44
  %vm46 = vcmask 917248
  %47 = vst.msk [vmem:[%s1] sm:$0xff] %vm46, %v45
  %s48 = scalar_lea.vmem %s0, 70
  %v49 = vld [vmem:[%s48] ss:$8 sm:$0xf]
  %s50 = scalar_lea.vmem %s0, 70
  %v51 = vld [vmem:[%s50] ss:$8 sm:$0xf0]
  %vm52 = vcmask 1047556
  %v53 = vsel %vm52, %v51, %v49
  %54 = vrot.lane.b32.xlu0 %v53, 96
  %v55 = vpop.permute.xlu0 %54
  %vm56 = vcmask 917248
  %s57 = scalar_lea.vmem %s1, 8
  %58 = vst.msk [vmem:[%s57] sm:$0xff] %vm56, %v55
  %s59 = scalar_lea.vmem %s0, 5
  %v60 = vld [vmem:[%s59] ss:$8 sm:$0xf]
  %s61 = scalar_lea.vmem %s0, 5
  %v62 = vld [vmem:[%s61] ss:$8 sm:$0xf0]
  %vm63 = vcmask 1047556
  %v64 = vsel %vm63, %v62, %v60
  %65 = vrot.lane.b32.xlu0 %v64, 80
  %v66 = vpop.permute.xlu0 %65
  %vm67 = vcmask 786048
  %68 = vst.msk [vmem:[%s1] sm:$0xff] %vm67, %v66
  %s69 = scalar_lea.vmem %s0, 69
  %v70 = vld [vmem:[%s69] ss:$8 sm:$0xf]
  %s71 = scalar_lea.vmem %s0, 69
  %v72 = vld [vmem:[%s71] ss:$8 sm:$0xf0]
  %vm73 = vcmask 1047556
  %v74 = vsel %vm73, %v72, %v70
  %75 = vrot.lane.b32.xlu0 %v74, 80
  %v76 = vpop.permute.xlu0 %75
  %vm77 = vcmask 786048
  %s78 = scalar_lea.vmem %s1, 8
  %79 = vst.msk [vmem:[%s78] sm:$0xff] %vm77, %v76
  %s80 = scalar_lea.vmem %s0, 4
  %v81 = vld [vmem:[%s80] ss:$8 sm:$0xf]
  %s82 = scalar_lea.vmem %s0, 4
  %v83 = vld [vmem:[%s82] ss:$8 sm:$0xf0]
  %vm84 = vcmask 1047556
  %v85 = vsel %vm84, %v83, %v81
  %86 = vrot.lane.b32.xlu0 %v85, 64
  %v87 = vpop.permute.xlu0 %86
  %vm88 = vcmask 654848
  %89 = vst.msk [vmem:[%s1] sm:$0xff] %vm88, %v87
  %s90 = scalar_lea.vmem %s0, 68
  %v91 = vld [vmem:[%s90] ss:$8 sm:$0xf]
  %s92 = scalar_lea.vmem %s0, 68
  %v93 = vld [vmem:[%s92] ss:$8 sm:$0xf0]
  %vm94 = vcmask 1047556
  %v95 = vsel %vm94, %v93, %v91
  %96 = vrot.lane.b32.xlu0 %v95, 64
  %v97 = vpop.permute.xlu0 %96
  %vm98 = vcmask 654848
  %s99 = scalar_lea.vmem %s1, 8
  %100 = vst.msk [vmem:[%s99] sm:$0xff] %vm98, %v97
  %s101 = scalar_lea.vmem %s0, 3
  %v102 = vld [vmem:[%s101] ss:$8 sm:$0xf]
  %s103 = scalar_lea.vmem %s0, 3
  %v104 = vld [vmem:[%s103] ss:$8 sm:$0xf0]
  %vm105 = vcmask 1047556
  %v106 = vsel %vm105, %v104, %v102
  %107 = vrot.lane.b32.xlu0 %v106, 48
  %v108 = vpop.permute.xlu0 %107
  %vm109 = vcmask 523648
  %110 = vst.msk [vmem:[%s1] sm:$0xff] %vm109, %v108
  %s111 = scalar_lea.vmem %s0, 67
  %v112 = vld [vmem:[%s111] ss:$8 sm:$0xf]
  %s113 = scalar_lea.vmem %s0, 67
  %v114 = vld [vmem:[%s113] ss:$8 sm:$0xf0]
  %vm115 = vcmask 1047556
  %v116 = vsel %vm115, %v114, %v112
  %117 = vrot.lane.b32.xlu0 %v116, 48
  %v118 = vpop.permute.xlu0 %117
  %vm119 = vcmask 523648
  %s120 = scalar_lea.vmem %s1, 8
  %121 = vst.msk [vmem:[%s120] sm:$0xff] %vm119, %v118
  %s122 = scalar_lea.vmem %s0, 2
  %v123 = vld [vmem:[%s122] ss:$8 sm:$0xf]
  %s124 = scalar_lea.vmem %s0, 2
  %v125 = vld [vmem:[%s124] ss:$8 sm:$0xf0]
  %vm126 = vcmask 1047556
  %v127 = vsel %vm126, %v125, %v123
  %128 = vrot.lane.b32.xlu0 %v127, 32
  %v129 = vpop.permute.xlu0 %128
  %vm130 = vcmask 392448
  %131 = vst.msk [vmem:[%s1] sm:$0xff] %vm130, %v129
  %s132 = scalar_lea.vmem %s0, 66
  %v133 = vld [vmem:[%s132] ss:$8 sm:$0xf]
  %s134 = scalar_lea.vmem %s0, 66
  %v135 = vld [vmem:[%s134] ss:$8 sm:$0xf0]
  %vm136 = vcmask 1047556
  %v137 = vsel %vm136, %v135, %v133
  %138 = vrot.lane.b32.xlu0 %v137, 32
  %v139 = vpop.permute.xlu0 %138
  %vm140 = vcmask 392448
  %s141 = scalar_lea.vmem %s1, 8
  %142 = vst.msk [vmem:[%s141] sm:$0xff] %vm140, %v139
  %s143 = scalar_lea.vmem %s0, 1
  %v144 = vld [vmem:[%s143] ss:$8 sm:$0xf]
  %s145 = scalar_lea.vmem %s0, 1
  %v146 = vld [vmem:[%s145] ss:$8 sm:$0xf0]
  %vm147 = vcmask 1047556
  %v148 = vsel %vm147, %v146, %v144
  %149 = vrot.lane.b32.xlu0 %v148, 16
  %v150 = vpop.permute.xlu0 %149
  %vm151 = vcmask 261248
  %152 = vst.msk [vmem:[%s1] sm:$0xff] %vm151, %v150
  %s153 = scalar_lea.vmem %s0, 65
  %v154 = vld [vmem:[%s153] ss:$8 sm:$0xf]
  %s155 = scalar_lea.vmem %s0, 65
  %v156 = vld [vmem:[%s155] ss:$8 sm:$0xf0]
  %vm157 = vcmask 1047556
  %v158 = vsel %vm157, %v156, %v154
  %159 = vrot.lane.b32.xlu0 %v158, 16
  %v160 = vpop.permute.xlu0 %159
  %vm161 = vcmask 261248
  %s162 = scalar_lea.vmem %s1, 8
  %163 = vst.msk [vmem:[%s162] sm:$0xff] %vm161, %v160

// kernel: llama_forward.1
$region0: #{llama_forward.1}
  #allocation0 [shape = 'u32[]', space=smem, size = 0x4, offset = 0x4, fixed_abs, tag = 'smem constant byte address 0x4 - core index']
  #allocation1 [shape = 'u32[144,128]{1,0:T(1,128)}', space=vmem, size = 0x12000, scoped, tag = 'internal scratch']
  %s0 = inlined_call_operand.vmem [shape: f32[16,64], index: 0, kind: input, shape index: {}]
  %s1 = inlined_call_operand.vmem [shape: f32[16,128], index: 1, kind: input, shape index: {}]
  %s2 = inlined_call_operand.vmem [shape: f32[16,128], index: 2, kind: input, shape index: {}]
  %s3 = inlined_call_operand.vmem [shape: f32[16,64], index: 3, kind: input, shape index: {}]
  %s4 = inlined_call_operand.vmem [shape: f32[64,64], index: 4, kind: input, shape index: {}]
  %s5 = inlined_call_operand.vmem [shape: f32[2,1,64], index: 5, kind: input, shape index: {}]
  %s6 = inlined_call_operand.vmem [shape: bf16[2,64,320], index: 6, kind: input, shape index: {}]
  %s7 = inlined_call_operand.vmem [shape: bf16[2,64,64], index: 7, kind: input, shape index: {}]
  %s8 = inlined_call_operand.vmem [shape: f32[2,1,64], index: 8, kind: input, shape index: {}]
  %s9 = inlined_call_operand.vmem [shape: bf16[2,64,256], index: 9, kind: input, shape index: {}]
  %s10 = inlined_call_operand.vmem [shape: bf16[2,128,64], index: 10, kind: input, shape index: {}]
  %s11 = inlined_call_operand.vmem [shape: f32[1,64], index: 11, kind: input, shape index: {}]
  %s12 = inlined_call_operand.vmem [shape: f32[8,128], index: 12, kind: output, shape index: {}]
  %s13 = sld [smem:[#allocation0]]
  $region58: #{llama_forward.1} parent=0
    _
  %s15 = ssub.s32 1, %s13
  %s16 = scalar_select 0, %s15, %s13
  // Predicated region
  $region2: #{llama_forward.1} parent=0 // pred_check
    _
  $region3: #{llama_forward.1} parent=0 // pred_check_branch
    %18 = sbr.rel (0) target = $region5
  $region4: #{llama_forward.1} parent=0 // pred_region
    _
  $region5: #{llama_forward.1} parent=0 // pred_fallthru
    _
  // Predicated region
  $region6: #{llama_forward.1} parent=0 // pred_check
    _
  $region7: #{llama_forward.1} parent=0 // pred_check_branch
    %20 = sbr.rel (0) target = $region9
  $region8: #{llama_forward.1} parent=0 // pred_region
    _
  $region9: #{llama_forward.1} parent=0 // pred_fallthru
    _
  // Predicated region
  $region10: #{llama_forward.1} parent=0 // pred_check
    _
  $region11: #{llama_forward.1} parent=0 // pred_check_branch
    %22 = sbr.rel (0) target = $region13
  $region12: #{llama_forward.1} parent=0 // pred_region
    _
  $region13: #{llama_forward.1} parent=0 // pred_fallthru
    _
  // Predicated region
  $region14: #{llama_forward.1} parent=0 // pred_check
    _
  $region15: #{llama_forward.1} parent=0 // pred_check_branch
    %24 = sbr.rel (0) target = $region17
  $region16: #{llama_forward.1} parent=0 // pred_region
    _
  $region17: #{llama_forward.1} parent=0 // pred_fallthru
    _
  // Predicated region
  $region18: #{llama_forward.1} parent=0 // pred_check
    _
  $region19: #{llama_forward.1} parent=0 // pred_check_branch
    %26 = sbr.rel (0) target = $region21
  $region20: #{llama_forward.1} parent=0 // pred_region
    _
  $region21: #{llama_forward.1} parent=0 // pred_fallthru
    _
  // Predicated region
  $region22: #{llama_forward.1} parent=0 // pred_check
    _
  $region23: #{llama_forward.1} parent=0 // pred_check_branch
    %28 = sbr.rel (0) target = $region25
  $region24: #{llama_forward.1} parent=0 // pred_region
    _
  $region25: #{llama_forward.1} parent=0 // pred_fallthru
    _
  // Predicated region
  $region26: #{llama_forward.1} parent=0 // pred_check
    _
  $region27: #{llama_forward.1} parent=0 // pred_check_branch
    %30 = sbr.rel (0) target = $region29
  $region28: #{llama_forward.1} parent=0 // pred_region
    _
  $region29: #{llama_forward.1} parent=0 // pred_fallthru
    _
  // Predicated region
  $region30: #{llama_forward.1} parent=0 // pred_check
    _
  $region31: #{llama_forward.1} parent=0 // pred_check_branch
    %32 = sbr.rel (0) target = $region33
  $region32: #{llama_forward.1} parent=0 // pred_region
    _
  $region33: #{llama_forward.1} parent=0 // pred_fallthru
    _
  // Predicated region
  $region34: #{llama_forward.1} parent=0 // pred_check
    _
  $region35: #{llama_forward.1} parent=0 // pred_check_branch
    %34 = sbr.rel (0) target = $region37
  $region36: #{llama_forward.1} parent=0 // pred_region
    _
  $region37: #{llama_forward.1} parent=0 // pred_fallthru
    _
  // Predicated region
  $region38: #{llama_forward.1} parent=0 // pred_check
    _
  $region39: #{llama_forward.1} parent=0 // pred_check_branch
    %36 = sbr.rel (0) target = $region41
  $region40: #{llama_forward.1} parent=0 // pred_region
    _
  $region41: #{llama_forward.1} parent=0 // pred_fallthru
    _
  // Predicated region
  $region42: #{llama_forward.1} parent=0 // pred_check
    _
  $region43: #{llama_forward.1} parent=0 // pred_check_branch
    %38 = sbr.rel (0) target = $region45
  $region44: #{llama_forward.1} parent=0 // pred_region
    _
  $region45: #{llama_forward.1} parent=0 // pred_fallthru
    _
  // Predicated region
  $region46: #{llama_forward.1} parent=0 // pred_check
    _
  $region47: #{llama_forward.1} parent=0 // pred_check_branch
    %40 = sbr.rel (0) target = $region49
  $region48: #{llama_forward.1} parent=0 // pred_region
    _
  $region49: #{llama_forward.1} parent=0 // pred_fallthru
    _
  %v42 = vld [vmem:[%s0] sm:$0xff]
  %v43 = vld [vmem:[%s0 + $0x8] sm:$0xff]
  %v44 = vld [vmem:[%s1] sm:$0xff]
  %v45 = vld [vmem:[%s1 + $0x8] sm:$0xff]
  %v46 = vld [vmem:[%s2] sm:$0xff]
  %v47 = vld [vmem:[%s2 + $0x8] sm:$0xff]
  %v48 = vld [vmem:[%s3] sm:$0xff]
  %v49 = vld [vmem:[%s3 + $0x8] sm:$0xff]
  %v50 = vld [vmem:[%s4] sm:$0xff]
  %v51 = vld [vmem:[%s4 + $0x8] sm:$0xff]
  %v52 = vld [vmem:[%s4 + $0x10] sm:$0xff]
  %v53 = vld [vmem:[%s4 + $0x18] sm:$0xff]
  %v54 = vld [vmem:[%s4 + $0x20] sm:$0xff]
  %v55 = vld [vmem:[%s4 + $0x28] sm:$0xff]
  %v56 = vld [vmem:[%s4 + $0x30] sm:$0xff]
  %v57 = vld [vmem:[%s4 + $0x38] sm:$0xff]
  %v58 = vld [vmem:[%s5] sm:$0x1]
  %v59 = vmul.f32 %v42, %v42
  %v60 = vmul.f32 %v43, %v43
  %vm61 = vcmask 523264
  %v62 = vsel %vm61, %v59, 0.0
  %63 = vadd.xlane.f32.xlu0 %v62
  %v64 = vpop.xlane.xlu0 %63
  %v65 = vsel %vm61, %v60, 0.0
  %66 = vadd.xlane.f32.xlu0 %v65
  %v67 = vpop.xlane.xlu0 %66
  %v68 = vrcp.pop 64.0
  %v69 = vmul.f32 %v64, %v68
  %v70 = vmul.f32 %v67, %v68
  %v71 = vadd.f32 %v69, 1e-06
  %v72 = vadd.f32 %v70, 1e-06
  %v73 = vrsqrt.pop %v71
  %v74 = vrsqrt.pop %v72
  %v75 = vmul.f32 %v42, %v73
  %v76 = vmul.f32 %v43, %v74
  %v78 = vlaneseq
  %v79 = vshrl.u32 %v78, 7
  %v80 = vsub.s32 0, %v79
  %v81 = vrot.slane %v58, %v80
  %v83 = vmul.f32 %v75, %v81
  %v84 = vmul.f32 %v76, %v81
  %v85 = vpack.c.bf16 %v84, %v83
  %v86 = vld [vmem:[%s6] sm:$0xff]
  %v87 = vld [vmem:[%s6 + $0x8] sm:$0xf]
  %v88 = vld [vmem:[%s6 + $0xc] sm:$0xff]
  %v89 = vld [vmem:[%s6 + $0x14] sm:$0xf]
  %v90 = vld [vmem:[%s6 + $0x18] sm:$0xff]
  %v91 = vld [vmem:[%s6 + $0x20] sm:$0xf]
  %v92 = vld [vmem:[%s6 + $0x24] sm:$0xff]
  %v93 = vld [vmem:[%s6 + $0x2c] sm:$0xf]
  %v94 = vld [vmem:[%s6 + $0x30] sm:$0xff]
  %v95 = vld [vmem:[%s6 + $0x38] sm:$0xf]
  %v96 = vld [vmem:[%s6 + $0x3c] sm:$0xff]
  %v97 = vld [vmem:[%s6 + $0x44] sm:$0xf]
  %v98 = vld [vmem:[%s6 + $0x48] sm:$0xff]
  %v99 = vld [vmem:[%s6 + $0x50] sm:$0xf]
  %v100 = vld [vmem:[%s6 + $0x54] sm:$0xff]
  %v101 = vld [vmem:[%s6 + $0x5c] sm:$0xf]
  %v118 = vunpack.c.l.b16 %v86
  %v119 = vunpack.c.h.b16 %v86
  %v120 = vunpack.c.l.b16 %v87
  %v121 = vunpack.c.l.b16 %v88
  %v122 = vunpack.c.h.b16 %v88
  %v123 = vunpack.c.l.b16 %v89
  %v124 = vunpack.c.l.b16 %v90
  %v125 = vunpack.c.h.b16 %v90
  %v126 = vunpack.c.l.b16 %v91
  %v127 = vunpack.c.l.b16 %v92
  %v128 = vunpack.c.h.b16 %v92
  %v129 = vunpack.c.l.b16 %v93
  %v130 = vunpack.c.l.b16 %v94
  %v131 = vunpack.c.h.b16 %v94
  %v132 = vunpack.c.l.b16 %v95
  %v133 = vunpack.c.l.b16 %v96
  %v134 = vunpack.c.h.b16 %v96
  %v135 = vunpack.c.l.b16 %v97
  %v136 = vunpack.c.l.b16 %v98
  %v137 = vunpack.c.h.b16 %v98
  %v138 = vunpack.c.l.b16 %v99
  %v139 = vunpack.c.l.b16 %v100
  %v140 = vunpack.c.h.b16 %v100
  %v141 = vunpack.c.l.b16 %v101
  %v142 = vpack.c.b16 %v121, %v118
  %v143 = vpack.c.b16 %v122, %v119
  %v144 = vpack.c.b16 %v123, %v120
  %v145 = vpack.c.b16 %v127, %v124
  %v146 = vpack.c.b16 %v128, %v125
  %v147 = vpack.c.b16 %v129, %v126
  %v148 = vpack.c.b16 %v133, %v130
  %v149 = vpack.c.b16 %v134, %v131
  %v150 = vpack.c.b16 %v135, %v132
  %v151 = vpack.c.b16 %v139, %v136
  %v152 = vpack.c.b16 %v140, %v137
  %v153 = vpack.c.b16 %v141, %v138
  %v167 = vsel %vm61, %v85, 0
  %169 = vmatprep.subr.bf16.mxu0 %v143
  %170 = vmatpush1.bf16.msra.mxu0 %v142
  %171 = vmatprep.subr.bf16.mxu0 %v146
  %172 = vmatpush1.bf16.msra.mxu0 %v145
  %173 = vmatprep.subr.bf16.mxu0 %v149
  %174 = vmatpush1.bf16.msra.mxu0 %v148
  %175 = vmatprep.subr.bf16.mxu0 %v152
  %176 = vmatpush1.bf16.msra.mxu0 %v151
  %177 = vmatprep.subr.bf16.mxu0 0
  %178 = vmatpush1.bf16.msra.mxu0 0
  %179 = vmatprep.subr.bf16.mxu0 0
  %180 = vmatpush1.bf16.msra.mxu0 0
  %181 = vmatprep.subr.bf16.mxu0 0
  %182 = vmatpush1.bf16.msra.mxu0 0
  %183 = vmatprep.subr.bf16.mxu0 0
  %184 = vmatpush1.bf16.msra.mxu0 0
  %185 = vmatprep.subr.bf16.mxu0 0
  %186 = vmatpush1.bf16.msra.mxu0 0
  %187 = vmatprep.subr.bf16.mxu0 0
  %188 = vmatpush1.bf16.msra.mxu0 0
  %189 = vmatprep.subr.bf16.mxu0 0
  %190 = vmatpush1.bf16.msra.mxu0 0
  %191 = vmatprep.subr.bf16.mxu0 0
  %192 = vmatpush1.bf16.msra.mxu0 0
  %193 = vmatprep.subr.bf16.mxu0 0
  %194 = vmatpush1.bf16.msra.mxu0 0
  %195 = vmatprep.subr.bf16.mxu0 0
  %196 = vmatpush1.bf16.msra.mxu0 0
  %197 = vmatprep.subr.bf16.mxu0 0
  %198 = vmatpush1.bf16.msra.mxu0 0
  %199 = vmatprep.subr.bf16.mxu0 0
  %200 = vmatpush1.bf16.msra.mxu0 0
  %201 = vmatprep.mubr.bf16.mxu0 0
  %202 = vmatmul.mubr.bf16.gmra.mrb[0].mxu0 %v167
  %v203 = vpop.f32.mrb[0].mxu0
  %v204 = vadd.f32 0.0, %v203
  %v205 = vpop.f32.mrb[0].mxu0
  %v206 = vadd.f32 0.0, %v205
  %v207 = vpop.f32.mrb[0].mxu0
  %v208 = vadd.f32 0.0, %v207
  %v209 = vpop.f32.mrb[0].mxu0
  %v210 = vadd.f32 0.0, %v209
  %211 = vdwg.mxu0
  %212 = vmatprep.subr.bf16.mxu0 0
  %213 = vmatpush1.bf16.msra.mxu0 %v144
  %214 = vmatprep.subr.bf16.mxu0 0
  %215 = vmatpush1.bf16.msra.mxu0 %v147
  %216 = vmatprep.subr.bf16.mxu0 0
  %217 = vmatpush1.bf16.msra.mxu0 %v150
  %218 = vmatprep.subr.bf16.mxu0 0
  %219 = vmatpush1.bf16.msra.mxu0 %v153
  %220 = vmatprep.subr.bf16.mxu0 0
  %221 = vmatpush1.bf16.msra.mxu0 0
  %222 = vmatprep.subr.bf16.mxu0 0
  %223 = vmatpush1.bf16.msra.mxu0 0
  %224 = vmatprep.subr.bf16.mxu0 0
  %225 = vmatpush1.bf16.msra.mxu0 0
  %226 = vmatprep.subr.bf16.mxu0 0
  %227 = vmatpush1.bf16.msra.mxu0 0
  %228 = vmatprep.subr.bf16.mxu0 0
  %229 = vmatpush1.bf16.msra.mxu0 0
  %230 = vmatprep.subr.bf16.mxu0 0
  %231 = vmatpush1.bf16.msra.mxu0 0
  %232 = vmatprep.subr.bf16.mxu0 0
  %233 = vmatpush1.bf16.msra.mxu0 0
  %234 = vmatprep.subr.bf16.mxu0 0
  %235 = vmatpush1.bf16.msra.mxu0 0
  %236 = vmatprep.subr.bf16.mxu0 0
  %237 = vmatpush1.bf16.msra.mxu0 0
  %238 = vmatprep.subr.bf16.mxu0 0
  %239 = vmatpush1.bf16.msra.mxu0 0
  %240 = vmatprep.subr.bf16.mxu0 0
  %241 = vmatpush1.bf16.msra.mxu0 0
  %242 = vmatprep.subr.bf16.mxu0 0
  %243 = vmatpush1.bf16.msra.mxu0 0
  %244 = vmatprep.mubr.bf16.mxu0 0
  %245 = vmatmul.mubr.bf16.gmra.mrb[0].mxu0 %v167
  %v246 = vpop.f32.mrb[0].mxu0
  %v247 = vadd.f32 0.0, %v246
  %v248 = vpop.f32.mrb[0].mxu0
  %v249 = vpop.f32.mrb[0].mxu0
  %v250 = vadd.f32 0.0, %v249
  %v251 = vpop.f32.mrb[0].mxu0
  %252 = vdwg.mxu0
  %v253 = vmul.f32 %v204, %v44
  %v254 = vmul.f32 %v208, %v45
  %v255 = vmul.f32 %v206, %v46
  %v256 = vmul.f32 %v210, %v47
  %v257 = vadd.f32 %v253, %v255
  %v258 = vadd.f32 %v254, %v256
  %267 = vrot.lane.b32.xlu0 %v50, 64
  %v268 = vpop.permute.xlu0 %267
  %269 = vrot.lane.b32.xlu0 %v51, 64
  %v270 = vpop.permute.xlu0 %269
  %271 = vrot.lane.b32.xlu0 %v52, 64
  %v272 = vpop.permute.xlu0 %271
  %273 = vrot.lane.b32.xlu0 %v53, 64
  %v274 = vpop.permute.xlu0 %273
  %275 = vrot.lane.b32.xlu0 %v54, 64
  %v276 = vpop.permute.xlu0 %275
  %277 = vrot.lane.b32.xlu0 %v55, 64
  %v278 = vpop.permute.xlu0 %277
  %279 = vrot.lane.b32.xlu0 %v56, 64
  %v280 = vpop.permute.xlu0 %279
  %281 = vrot.lane.b32.xlu0 %v57, 64
  %v282 = vpop.permute.xlu0 %281
  %v291 = vmul.f32 %v257, %v268
  %v292 = vmul.f32 %v258, %v270
  %v293 = vmul.f32 %v257, %v272
  %v294 = vmul.f32 %v258, %v274
  %v295 = vmul.f32 %v257, %v276
  %v296 = vmul.f32 %v258, %v278
  %v297 = vmul.f32 %v257, %v280
  %v298 = vmul.f32 %v258, %v282
  %v299 = vpack.c.bf16 %v292, %v291
  %v300 = vpack.c.bf16 %v294, %v293
  %v301 = vpack.c.bf16 %v296, %v295
  %v302 = vpack.c.bf16 %v298, %v297
  %v303 = vmul.f32 %v247, %v50
  %v304 = vmul.f32 %v250, %v51
  %v305 = vmul.f32 %v247, %v52
  %v306 = vmul.f32 %v250, %v53
  %v307 = vmul.f32 %v247, %v54
  %v308 = vmul.f32 %v250, %v55
  %v309 = vmul.f32 %v247, %v56
  %v310 = vmul.f32 %v250, %v57
  %v311 = vpack.c.bf16 %v304, %v303
  %v312 = vpack.c.bf16 %v306, %v305
  %v313 = vpack.c.bf16 %v308, %v307
  %v314 = vpack.c.bf16 %v310, %v309
  %v315 = vpack.c.bf16 %v258, %v257
  %320 = vrot.lane.b32.xlu0 %v299, 64
  %v321 = vpop.permute.xlu0 %320
  %322 = vrot.lane.b32.xlu0 %v300, 64
  %v323 = vpop.permute.xlu0 %322
  %324 = vrot.lane.b32.xlu0 %v301, 64
  %v325 = vpop.permute.xlu0 %324
  %326 = vrot.lane.b32.xlu0 %v302, 64
  %v327 = vpop.permute.xlu0 %326
  %v329 = vsel %vm61, %v315, 0
  %v332 = vsel %vm61, %v321, 0
  %v335 = vsel %vm61, %v323, 0
  %v338 = vsel %vm61, %v325, 0
  %v341 = vsel %vm61, %v327, 0
  %343 = vmatprep.subr.bf16.mxu0 0
  %344 = vmatpush1.bf16.xpose.msra.mxu0 %v332
  %345 = vmatprep.subr.bf16.mxu0 0
  %346 = vmatpush1.bf16.xpose.msra.mxu0 %v335
  %347 = vmatprep.subr.bf16.mxu0 0
  %348 = vmatpush1.bf16.xpose.msra.mxu0 %v338
  %349 = vmatprep.subr.bf16.mxu0 0
  %350 = vmatpush1.bf16.xpose.msra.mxu0 %v341
  %351 = vmatprep.subr.bf16.mxu0 0
  %352 = vmatpush1.bf16.xpose.msra.mxu0 0
  %353 = vmatprep.subr.bf16.mxu0 0
  %354 = vmatpush1.bf16.xpose.msra.mxu0 0
  %355 = vmatprep.subr.bf16.mxu0 0
  %356 = vmatpush1.bf16.xpose.msra.mxu0 0
  %357 = vmatprep.subr.bf16.mxu0 0
  %358 = vmatpush1.bf16.xpose.msra.mxu0 0
  %359 = vmatprep.subr.bf16.mxu0 0
  %360 = vmatpush1.bf16.xpose.msra.mxu0 0
  %361 = vmatprep.subr.bf16.mxu0 0
  %362 = vmatpush1.bf16.xpose.msra.mxu0 0
  %363 = vmatprep.subr.bf16.mxu0 0
  %364 = vmatpush1.bf16.xpose.msra.mxu0 0
  %365 = vmatprep.subr.bf16.mxu0 0
  %366 = vmatpush1.bf16.xpose.msra.mxu0 0
  %367 = vmatprep.subr.bf16.mxu0 0
  %368 = vmatpush1.bf16.xpose.msra.mxu0 0
  %369 = vmatprep.subr.bf16.mxu0 0
  %370 = vmatpush1.bf16.xpose.msra.mxu0 0
  %371 = vmatprep.subr.bf16.mxu0 0
  %372 = vmatpush1.bf16.xpose.msra.mxu0 0
  %373 = vmatprep.subr.bf16.mxu0 0
  %374 = vmatpush1.bf16.xpose.msra.mxu0 0
  %375 = vmatprep.mubr.bf16.mxu0 0
  %376 = vmatmul.mubr.bf16.gmra.mrb[0].mxu0 %v329
  %v377 = vpop.f32.mrb[0].mxu0
  %v378 = vadd.f32 %v48, %v377
  %v379 = vpop.f32.mrb[0].mxu0
  %v380 = vpop.f32.mrb[0].mxu0
  %v381 = vadd.f32 %v49, %v380
  %v382 = vpop.f32.mrb[0].mxu0
  %383 = vdwg.mxu0
  %v384 = vsel %vm61, %v378, -inf
  %385 = vmax.xlane.f32.xlu0 %v384
  %v386 = vpop.xlane.xlu0 %385
  %v387 = vsel %vm61, %v381, -inf
  %388 = vmax.xlane.f32.xlu0 %v387
  %v389 = vpop.xlane.xlu0 %388
  %v390 = vsub.f32 %v378, %v386
  %v391 = vsub.f32 %v381, %v389
  %v392 = vmul.f32 %v390, 1.442695
  %v393 = vpow.pop %v392
  %v394 = vmul.f32 %v391, 1.442695
  %v395 = vpow.pop %v394
  %v397 = vsel %vm61, %v393, 0
  %v400 = vsel %vm61, %v395, 0
  %402 = vmatprep.subr.mxu0 0.0
  %403 = vmatpush1.msra.mxu0 %v50
  %404 = vmatprep.subr.mxu0 0.0
  %405 = vmatpush1.msra.mxu0 %v51
  %406 = vmatprep.subr.mxu0 0.0
  %407 = vmatpush1.msra.mxu0 %v52
  %408 = vmatprep.subr.mxu0 0.0
  %409 = vmatpush1.msra.mxu0 %v53
  %410 = vmatprep.subr.mxu0 0.0
  %411 = vmatpush1.msra.mxu0 %v54
  %412 = vmatprep.subr.mxu0 0.0
  %413 = vmatpush1.msra.mxu0 %v55
  %414 = vmatprep.subr.mxu0 0.0
  %415 = vmatpush1.msra.mxu0 %v56
  %416 = vmatprep.subr.mxu0 0.0
  %417 = vmatpush1.msra.mxu0 %v57
  %418 = vmatprep.subr.mxu0 0.0
  %419 = vmatpush1.msra.mxu0 0.0
  %420 = vmatprep.subr.mxu0 0.0
  %421 = vmatpush1.msra.mxu0 0.0
  %422 = vmatprep.subr.mxu0 0.0
  %423 = vmatpush1.msra.mxu0 0.0
  %424 = vmatprep.subr.mxu0 0.0
  %425 = vmatpush1.msra.mxu0 0.0
  %426 = vmatprep.subr.mxu0 0.0
  %427 = vmatpush1.msra.mxu0 0.0
  %428 = vmatprep.subr.mxu0 0.0
  %429 = vmatpush1.msra.mxu0 0.0
  %430 = vmatprep.subr.mxu0 0.0
  %431 = vmatpush1.msra.mxu0 0.0
  %432 = vmatprep.subr.mxu0 0.0
  %433 = vmatpush1.msra.mxu0 0.0
  %434 = vmatprep.subr.mxu0 0.0
  %435 = vmatpush1.msra.mxu0 0.0
  %436 = vmatprep.subr.mxu0 0.0
  %437 = vmatpush1.msra.mxu0 0.0
  %438 = vmatprep.subr.mxu0 0.0
  %439 = vmatpush1.msra.mxu0 0.0
  %440 = vmatprep.subr.mxu0 0.0
  %441 = vmatpush1.msra.mxu0 0.0
  %442 = vmatprep.subr.mxu0 0.0
  %443 = vmatpush1.msra.mxu0 0.0
  %444 = vmatprep.subr.mxu0 0.0
  %445 = vmatpush1.msra.mxu0 0.0
  %446 = vmatprep.subr.mxu0 0.0
  %447 = vmatpush1.msra.mxu0 0.0
  %448 = vmatprep.subr.mxu0 0.0
  %449 = vmatpush1.msra.mxu0 0.0
  %450 = vmatprep.subr.mxu0 0.0
  %451 = vmatpush1.msra.mxu0 0.0
  %452 = vmatprep.subr.mxu0 0.0
  %453 = vmatpush1.msra.mxu0 0.0
  %454 = vmatprep.subr.mxu0 0.0
  %455 = vmatpush1.msra.mxu0 0.0
  %456 = vmatprep.subr.mxu0 0.0
  %457 = vmatpush1.msra.mxu0 0.0
  %458 = vmatprep.subr.mxu0 0.0
  %459 = vmatpush1.msra.mxu0 0.0
  %460 = vmatprep.subr.mxu0 0.0
  %461 = vmatpush1.msra.mxu0 0.0
  %462 = vmatprep.subr.mxu0 0.0
  %463 = vmatpush1.msra.mxu0 0.0
  %464 = vmatprep.subr.mxu0 0.0
  %465 = vmatpush1.msra.mxu0 0.0
  %466 = vmatprep.mubr.f32.mxu0 0.0
  %467 = vmatmul.mubr.f32.gmra.mrb[0].mxu0 %v397
  %v468 = vpop.f32.mrb[0].mxu0
  %v469 = vadd.f32 0.0, %v468
  %v470 = vpop.f32.mrb[0].mxu0
  %471 = vmatprep.mubr.f32.mxu0 0.0
  %472 = vmatmul.mubr.f32.gmra.mrb[0].mxu0 %v400
  %v473 = vpop.f32.mrb[0].mxu0
  %v474 = vadd.f32 0.0, %v473
  %v475 = vpop.f32.mrb[0].mxu0
  %476 = vdwg.mxu0
  %v477 = vpack.c.bf16 %v395, %v393
  %v479 = vsel %vm61, %v477, 0
  %481 = vmatprep.subr.bf16.mxu0 0
  %482 = vmatpush1.bf16.msra.mxu0 %v311
  %483 = vmatprep.subr.bf16.mxu0 0
  %484 = vmatpush1.bf16.msra.mxu0 %v312
  %485 = vmatprep.subr.bf16.mxu0 0
  %486 = vmatpush1.bf16.msra.mxu0 %v313
  %487 = vmatprep.subr.bf16.mxu0 0
  %488 = vmatpush1.bf16.msra.mxu0 %v314
  %489 = vmatprep.subr.bf16.mxu0 0
  %490 = vmatpush1.bf16.msra.mxu0 0
  %491 = vmatprep.subr.bf16.mxu0 0
  %492 = vmatpush1.bf16.msra.mxu0 0
  %493 = vmatprep.subr.bf16.mxu0 0
  %494 = vmatpush1.bf16.msra.mxu0 0
  %495 = vmatprep.subr.bf16.mxu0 0
  %496 = vmatpush1.bf16.msra.mxu0 0
  %497 = vmatprep.subr.bf16.mxu0 0
  %498 = vmatpush1.bf16.msra.mxu0 0
  %499 = vmatprep.subr.bf16.mxu0 0
  %500 = vmatpush1.bf16.msra.mxu0 0
  %501 = vmatprep.subr.bf16.mxu0 0
  %502 = vmatpush1.bf16.msra.mxu0 0
  %503 = vmatprep.subr.bf16.mxu0 0
  %504 = vmatpush1.bf16.msra.mxu0 0
  %505 = vmatprep.subr.bf16.mxu0 0
  %506 = vmatpush1.bf16.msra.mxu0 0
  %507 = vmatprep.subr.bf16.mxu0 0
  %508 = vmatpush1.bf16.msra.mxu0 0
  %509 = vmatprep.subr.bf16.mxu0 0
  %510 = vmatpush1.bf16.msra.mxu0 0
  %511 = vmatprep.subr.bf16.mxu0 0
  %512 = vmatpush1.bf16.msra.mxu0 0
  %513 = vmatprep.mubr.bf16.mxu0 0
  %514 = vmatmul.mubr.bf16.gmra.mrb[0].mxu0 %v479
  %v515 = vpop.f32.mrb[0].mxu0
  %v516 = vadd.f32 0.0, %v515
  %v517 = vpop.f32.mrb[0].mxu0
  %v518 = vpop.f32.mrb[0].mxu0
  %v519 = vadd.f32 0.0, %v518
  %v520 = vpop.f32.mrb[0].mxu0
  %521 = vdwg.mxu0
  %v522 = vrcp.pop %v469
  %v523 = vrcp.pop %v474
  %v524 = vmul.f32 %v516, %v522
  %v525 = vmul.f32 %v519, %v523
  %v526 = vpack.c.bf16 %v525, %v524
  %v527 = vld [vmem:[%s7] sm:$0xf]
  %v528 = vld [vmem:[%s7 + $0x4] sm:$0xf]
  %v529 = vld [vmem:[%s7 + $0x8] sm:$0xf]
  %v530 = vld [vmem:[%s7 + $0xc] sm:$0xf]
  %v531 = vld [vmem:[%s7 + $0x10] sm:$0xf]
  %v532 = vld [vmem:[%s7 + $0x14] sm:$0xf]
  %v533 = vld [vmem:[%s7 + $0x18] sm:$0xf]
  %v534 = vld [vmem:[%s7 + $0x1c] sm:$0xf]
  %v543 = vunpack.c.l.b16 %v527
  %v544 = vunpack.c.l.b16 %v528
  %v545 = vunpack.c.l.b16 %v529
  %v546 = vunpack.c.l.b16 %v530
  %v547 = vunpack.c.l.b16 %v531
  %v548 = vunpack.c.l.b16 %v532
  %v549 = vunpack.c.l.b16 %v533
  %v550 = vunpack.c.l.b16 %v534
  %v551 = vpack.c.b16 %v544, %v543
  %v552 = vpack.c.b16 %v546, %v545
  %v553 = vpack.c.b16 %v548, %v547
  %v554 = vpack.c.b16 %v550, %v549
  %v560 = vsel %vm61, %v526, 0
  %562 = vmatprep.subr.bf16.mxu0 0
  %563 = vmatpush1.bf16.msra.mxu0 %v551
  %564 = vmatprep.subr.bf16.mxu0 0
  %565 = vmatpush1.bf16.msra.mxu0 %v552
  %566 = vmatprep.subr.bf16.mxu0 0
  %567 = vmatpush1.bf16.msra.mxu0 %v553
  %568 = vmatprep.subr.bf16.mxu0 0
  %569 = vmatpush1.bf16.msra.mxu0 %v554
  %570 = vmatprep.subr.bf16.mxu0 0
  %571 = vmatpush1.bf16.msra.mxu0 0
  %572 = vmatprep.subr.bf16.mxu0 0
  %573 = vmatpush1.bf16.msra.mxu0 0
  %574 = vmatprep.subr.bf16.mxu0 0
  %575 = vmatpush1.bf16.msra.mxu0 0
  %576 = vmatprep.subr.bf16.mxu0 0
  %577 = vmatpush1.bf16.msra.mxu0 0
  %578 = vmatprep.subr.bf16.mxu0 0
  %579 = vmatpush1.bf16.msra.mxu0 0
  %580 = vmatprep.subr.bf16.mxu0 0
  %581 = vmatpush1.bf16.msra.mxu0 0
  %582 = vmatprep.subr.bf16.mxu0 0
  %583 = vmatpush1.bf16.msra.mxu0 0
  %584 = vmatprep.subr.bf16.mxu0 0
  %585 = vmatpush1.bf16.msra.mxu0 0
  %586 = vmatprep.subr.bf16.mxu0 0
  %587 = vmatpush1.bf16.msra.mxu0 0
  %588 = vmatprep.subr.bf16.mxu0 0
  %589 = vmatpush1.bf16.msra.mxu0 0
  %590 = vmatprep.subr.bf16.mxu0 0
  %591 = vmatpush1.bf16.msra.mxu0 0
  %592 = vmatprep.subr.bf16.mxu0 0
  %593 = vmatpush1.bf16.msra.mxu0 0
  %594 = vmatprep.mubr.bf16.mxu0 0
  %595 = vmatmul.mubr.bf16.gmra.mrb[0].mxu0 %v560
  %v596 = vpop.f32.mrb[0].mxu0
  %v597 = vadd.f32 0.0, %v596
  %v598 = vpop.f32.mrb[0].mxu0
  %v599 = vpop.f32.mrb[0].mxu0
  %v600 = vadd.f32 0.0, %v599
  %v601 = vpop.f32.mrb[0].mxu0
  %602 = vdwg.mxu0
  %v603 = vadd.f32 %v42, %v597
  %v604 = vadd.f32 %v43, %v600
  %v605 = vld [vmem:[%s8] sm:$0x1]
  %v606 = vmul.f32 %v603, %v603
  %v607 = vmul.f32 %v604, %v604
  %v608 = vsel %vm61, %v606, 0.0
  %609 = vadd.xlane.f32.xlu0 %v608
  %v610 = vpop.xlane.xlu0 %609
  %v611 = vsel %vm61, %v607, 0.0
  %612 = vadd.xlane.f32.xlu0 %v611
  %v613 = vpop.xlane.xlu0 %612
  %v614 = vmul.f32 %v610, %v68
  %v615 = vmul.f32 %v613, %v68
  %v616 = vadd.f32 %v614, 1e-06
  %v617 = vadd.f32 %v615, 1e-06
  %v618 = vrsqrt.pop %v616
  %v619 = vrsqrt.pop %v617
  %v620 = vmul.f32 %v603, %v618
  %v621 = vmul.f32 %v604, %v619
  %v623 = vlaneseq
  %v624 = vshrl.u32 %v623, 7
  %v625 = vsub.s32 0, %v624
  %v626 = vrot.slane %v605, %v625
  %v628 = vmul.f32 %v620, %v626
  %v629 = vmul.f32 %v621, %v626
  %v630 = vpack.c.bf16 %v629, %v628
  %v631 = vld [vmem:[%s9] sm:$0xff]
  %v632 = vld [vmem:[%s9 + $0x8] sm:$0xff]
  %v633 = vld [vmem:[%s9 + $0x10] sm:$0xff]
  %v634 = vld [vmem:[%s9 + $0x18] sm:$0xff]
  %v635 = vld [vmem:[%s9 + $0x20] sm:$0xff]
  %v636 = vld [vmem:[%s9 + $0x28] sm:$0xff]
  %v637 = vld [vmem:[%s9 + $0x30] sm:$0xff]
  %v638 = vld [vmem:[%s9 + $0x38] sm:$0xff]
  %v647 = vunpack.c.l.b16 %v631
  %v648 = vunpack.c.h.b16 %v631
  %v649 = vunpack.c.l.b16 %v632
  %v650 = vunpack.c.h.b16 %v632
  %v651 = vunpack.c.l.b16 %v633
  %v652 = vunpack.c.h.b16 %v633
  %v653 = vunpack.c.l.b16 %v634
  %v654 = vunpack.c.h.b16 %v634
  %v655 = vunpack.c.l.b16 %v635
  %v656 = vunpack.c.h.b16 %v635
  %v657 = vunpack.c.l.b16 %v636
  %v658 = vunpack.c.h.b16 %v636
  %v659 = vunpack.c.l.b16 %v637
  %v660 = vunpack.c.h.b16 %v637
  %v661 = vunpack.c.l.b16 %v638
  %v662 = vunpack.c.h.b16 %v638
  %v663 = vpack.c.b16 %v649, %v647
  %v664 = vpack.c.b16 %v650, %v648
  %v665 = vpack.c.b16 %v653, %v651
  %v666 = vpack.c.b16 %v654, %v652
  %v667 = vpack.c.b16 %v657, %v655
  %v668 = vpack.c.b16 %v658, %v656
  %v669 = vpack.c.b16 %v661, %v659
  %v670 = vpack.c.b16 %v662, %v660
  %v680 = vsel %vm61, %v630, 0
  %682 = vmatprep.subr.bf16.mxu0 %v664
  %683 = vmatpush1.bf16.msra.mxu0 %v663
  %684 = vmatprep.subr.bf16.mxu0 %v666
  %685 = vmatpush1.bf16.msra.mxu0 %v665
  %686 = vmatprep.subr.bf16.mxu0 %v668
  %687 = vmatpush1.bf16.msra.mxu0 %v667
  %688 = vmatprep.subr.bf16.mxu0 %v670
  %689 = vmatpush1.bf16.msra.mxu0 %v669
  %690 = vmatprep.subr.bf16.mxu0 0
  %691 = vmatpush1.bf16.msra.mxu0 0
  %692 = vmatprep.subr.bf16.mxu0 0
  %693 = vmatpush1.bf16.msra.mxu0 0
  %694 = vmatprep.subr.bf16.mxu0 0
  %695 = vmatpush1.bf16.msra.mxu0 0
  %696 = vmatprep.subr.bf16.mxu0 0
  %697 = vmatpush1.bf16.msra.mxu0 0
  %698 = vmatprep.subr.bf16.mxu0 0
  %699 = vmatpush1.bf16.msra.mxu0 0
  %700 = vmatprep.subr.bf16.mxu0 0
  %701 = vmatpush1.bf16.msra.mxu0 0
  %702 = vmatprep.subr.bf16.mxu0 0
  %703 = vmatpush1.bf16.msra.mxu0 0
  %704 = vmatprep.subr.bf16.mxu0 0
  %705 = vmatpush1.bf16.msra.mxu0 0
  %706 = vmatprep.subr.bf16.mxu0 0
  %707 = vmatpush1.bf16.msra.mxu0 0
  %708 = vmatprep.subr.bf16.mxu0 0
  %709 = vmatpush1.bf16.msra.mxu0 0
  %710 = vmatprep.subr.bf16.mxu0 0
  %711 = vmatpush1.bf16.msra.mxu0 0
  %712 = vmatprep.subr.bf16.mxu0 0
  %713 = vmatpush1.bf16.msra.mxu0 0
  %714 = vmatprep.mubr.bf16.mxu0 0
  %715 = vmatmul.mubr.bf16.gmra.mrb[0].mxu0 %v680
  %v716 = vpop.f32.mrb[0].mxu0
  %v717 = vadd.f32 0.0, %v716
  %v718 = vpop.f32.mrb[0].mxu0
  %v719 = vadd.f32 0.0, %v718
  %v720 = vpop.f32.mrb[0].mxu0
  %v721 = vadd.f32 0.0, %v720
  %v722 = vpop.f32.mrb[0].mxu0
  %v723 = vadd.f32 0.0, %v722
  %724 = vdwg.mxu0
  %v725 = vxor.u32 %v717, 2147483648
  %v726 = vxor.u32 %v721, 2147483648
  %v727 = vmul.f32 %v725, 1.442695
  %v728 = vpow.pop %v727
  %v729 = vmul.f32 %v726, 1.442695
  %v730 = vpow.pop %v729
  %v731 = vadd.f32 %v728, 1.0
  %v732 = vadd.f32 %v730, 1.0
  %v733 = vrcp.pop %v731
  %v734 = vmul.f32 1.0, %v733
  %v735 = vrcp.pop %v732
  %v736 = vmul.f32 1.0, %v735
  %v737 = vmul.f32 %v717, %v734
  %v738 = vmul.f32 %v721, %v736
  %v739 = vmul.f32 %v737, %v719
  %v740 = vmul.f32 %v738, %v723
  %v741 = vpack.c.bf16 %v740, %v739
  %v742 = vld [vmem:[%s10] sm:$0xf]
  %v743 = vld [vmem:[%s10 + $0x4] sm:$0xf]
  %v744 = vld [vmem:[%s10 + $0x8] sm:$0xf]
  %v745 = vld [vmem:[%s10 + $0xc] sm:$0xf]
  %v746 = vld [vmem:[%s10 + $0x10] sm:$0xf]
  %v747 = vld [vmem:[%s10 + $0x14] sm:$0xf]
  %v748 = vld [vmem:[%s10 + $0x18] sm:$0xf]
  %v749 = vld [vmem:[%s10 + $0x1c] sm:$0xf]
  %v750 = vld [vmem:[%s10 + $0x20] sm:$0xf]
  %v751 = vld [vmem:[%s10 + $0x24] sm:$0xf]
  %v752 = vld [vmem:[%s10 + $0x28] sm:$0xf]
  %v753 = vld [vmem:[%s10 + $0x2c] sm:$0xf]
  %v754 = vld [vmem:[%s10 + $0x30] sm:$0xf]
  %v755 = vld [vmem:[%s10 + $0x34] sm:$0xf]
  %v756 = vld [vmem:[%s10 + $0x38] sm:$0xf]
  %v757 = vld [vmem:[%s10 + $0x3c] sm:$0xf]
  %v774 = vunpack.c.l.b16 %v742
  %v775 = vunpack.c.l.b16 %v743
  %v776 = vunpack.c.l.b16 %v744
  %v777 = vunpack.c.l.b16 %v745
  %v778 = vunpack.c.l.b16 %v746
  %v779 = vunpack.c.l.b16 %v747
  %v780 = vunpack.c.l.b16 %v748
  %v781 = vunpack.c.l.b16 %v749
  %v782 = vunpack.c.l.b16 %v750
  %v783 = vunpack.c.l.b16 %v751
  %v784 = vunpack.c.l.b16 %v752
  %v785 = vunpack.c.l.b16 %v753
  %v786 = vunpack.c.l.b16 %v754
  %v787 = vunpack.c.l.b16 %v755
  %v788 = vunpack.c.l.b16 %v756
  %v789 = vunpack.c.l.b16 %v757
  %v790 = vpack.c.b16 %v775, %v774
  %v791 = vpack.c.b16 %v777, %v776
  %v792 = vpack.c.b16 %v779, %v778
  %v793 = vpack.c.b16 %v781, %v780
  %v794 = vpack.c.b16 %v783, %v782
  %v795 = vpack.c.b16 %v785, %v784
  %v796 = vpack.c.b16 %v787, %v786
  %v797 = vpack.c.b16 %v789, %v788
  %806 = vmatprep.subr.bf16.mxu0 0
  %807 = vmatpush1.bf16.msra.mxu0 %v790
  %808 = vmatprep.subr.bf16.mxu0 0
  %809 = vmatpush1.bf16.msra.mxu0 %v791
  %810 = vmatprep.subr.bf16.mxu0 0
  %811 = vmatpush1.bf16.msra.mxu0 %v792
  %812 = vmatprep.subr.bf16.mxu0 0
  %813 = vmatpush1.bf16.msra.mxu0 %v793
  %814 = vmatprep.subr.bf16.mxu0 0
  %815 = vmatpush1.bf16.msra.mxu0 %v794
  %816 = vmatprep.subr.bf16.mxu0 0
  %817 = vmatpush1.bf16.msra.mxu0 %v795
  %818 = vmatprep.subr.bf16.mxu0 0
  %819 = vmatpush1.bf16.msra.mxu0 %v796
  %820 = vmatprep.subr.bf16.mxu0 0
  %821 = vmatpush1.bf16.msra.mxu0 %v797
  %822 = vmatprep.subr.bf16.mxu0 0
  %823 = vmatpush1.bf16.msra.mxu0 0
  %824 = vmatprep.subr.bf16.mxu0 0
  %825 = vmatpush1.bf16.msra.mxu0 0
  %826 = vmatprep.subr.bf16.mxu0 0
  %827 = vmatpush1.bf16.msra.mxu0 0
  %828 = vmatprep.subr.bf16.mxu0 0
  %829 = vmatpush1.bf16.msra.mxu0 0
  %830 = vmatprep.subr.bf16.mxu0 0
  %831 = vmatpush1.bf16.msra.mxu0 0
  %832 = vmatprep.subr.bf16.mxu0 0
  %833 = vmatpush1.bf16.msra.mxu0 0
  %834 = vmatprep.subr.bf16.mxu0 0
  %835 = vmatpush1.bf16.msra.mxu0 0
  %836 = vmatprep.subr.bf16.mxu0 0
  %837 = vmatpush1.bf16.msra.mxu0 0
  %838 = vmatprep.mubr.bf16.mxu0 0
  %839 = vmatmul.mubr.bf16.gmra.mrb[0].mxu0 %v741
  %v840 = vpop.f32.mrb[0].mxu0
  %v841 = vadd.f32 0.0, %v840
  %v842 = vpop.f32.mrb[0].mxu0
  %v843 = vpop.f32.mrb[0].mxu0
  %v844 = vadd.f32 0.0, %v843
  %v845 = vpop.f32.mrb[0].mxu0
  %846 = vdwg.mxu0
  %v847 = vadd.f32 %v603, %v841
  %v848 = vadd.f32 %v604, %v844
  %s849 = scalar_lea.vmem %s5, 1
  %v850 = vld [vmem:[%s849] sm:$0x1]
  %v851 = vmul.f32 %v847, %v847
  %v852 = vmul.f32 %v848, %v848
  %v853 = vsel %vm61, %v851, 0.0
  %854 = vadd.xlane.f32.xlu0 %v853
  %v855 = vpop.xlane.xlu0 %854
  %v856 = vsel %vm61, %v852, 0.0
  %857 = vadd.xlane.f32.xlu0 %v856
  %v858 = vpop.xlane.xlu0 %857
  %v859 = vmul.f32 %v855, %v68
  %v860 = vmul.f32 %v858, %v68
  %v861 = vadd.f32 %v859, 1e-06
  %v862 = vadd.f32 %v860, 1e-06
  %v863 = vrsqrt.pop %v861
  %v864 = vrsqrt.pop %v862
  %v865 = vmul.f32 %v847, %v863
  %v866 = vmul.f32 %v848, %v864
  %v868 = vlaneseq
  %v869 = vshrl.u32 %v868, 7
  %v870 = vsub.s32 0, %v869
  %v871 = vrot.slane %v850, %v870
  %v873 = vmul.f32 %v865, %v871
  %v874 = vmul.f32 %v866, %v871
  %v875 = vpack.c.bf16 %v874, %v873
  %s876 = scalar_lea.vmem %s6, 96
  %v877 = vld [vmem:[%s876] sm:$0xff]
  %v878 = vld [vmem:[%s876 + $0x8] sm:$0xf]
  %v879 = vld [vmem:[%s876 + $0xc] sm:$0xff]
  %v880 = vld [vmem:[%s876 + $0x14] sm:$0xf]
  %v881 = vld [vmem:[%s876 + $0x18] sm:$0xff]
  %v882 = vld [vmem:[%s876 + $0x20] sm:$0xf]
  %v883 = vld [vmem:[%s876 + $0x24] sm:$0xff]
  %v884 = vld [vmem:[%s876 + $0x2c] sm:$0xf]
  %v885 = vld [vmem:[%s876 + $0x30] sm:$0xff]
  %v886 = vld [vmem:[%s876 + $0x38] sm:$0xf]
  %v887 = vld [vmem:[%s876 + $0x3c] sm:$0xff]
  %v888 = vld [vmem:[%s876 + $0x44] sm:$0xf]
  %v889 = vld [vmem:[%s876 + $0x48] sm:$0xff]
  %v890 = vld [vmem:[%s876 + $0x50] sm:$0xf]
  %v891 = vld [vmem:[%s876 + $0x54] sm:$0xff]
  %v892 = vld [vmem:[%s876 + $0x5c] sm:$0xf]
  %v909 = vunpack.c.l.b16 %v877
  %v910 = vunpack.c.h.b16 %v877
  %v911 = vunpack.c.l.b16 %v878
  %v912 = vunpack.c.l.b16 %v879
  %v913 = vunpack.c.h.b16 %v879
  %v914 = vunpack.c.l.b16 %v880
  %v915 = vunpack.c.l.b16 %v881
  %v916 = vunpack.c.h.b16 %v881
  %v917 = vunpack.c.l.b16 %v882
  %v918 = vunpack.c.l.b16 %v883
  %v919 = vunpack.c.h.b16 %v883
  %v920 = vunpack.c.l.b16 %v884
  %v921 = vunpack.c.l.b16 %v885
  %v922 = vunpack.c.h.b16 %v885
  %v923 = vunpack.c.l.b16 %v886
  %v924 = vunpack.c.l.b16 %v887
  %v925 = vunpack.c.h.b16 %v887
  %v926 = vunpack.c.l.b16 %v888
  %v927 = vunpack.c.l.b16 %v889
  %v928 = vunpack.c.h.b16 %v889
  %v929 = vunpack.c.l.b16 %v890
  %v930 = vunpack.c.l.b16 %v891
  %v931 = vunpack.c.h.b16 %v891
  %v932 = vunpack.c.l.b16 %v892
  %v933 = vpack.c.b16 %v912, %v909
  %v934 = vpack.c.b16 %v913, %v910
  %v935 = vpack.c.b16 %v914, %v911
  %v936 = vpack.c.b16 %v918, %v915
  %v937 = vpack.c.b16 %v919, %v916
  %v938 = vpack.c.b16 %v920, %v917
  %v939 = vpack.c.b16 %v924, %v921
  %v940 = vpack.c.b16 %v925, %v922
  %v941 = vpack.c.b16 %v926, %v923
  %v942 = vpack.c.b16 %v930, %v927
  %v943 = vpack.c.b16 %v931, %v928
  %v944 = vpack.c.b16 %v932, %v929
  %v958 = vsel %vm61, %v875, 0
  %960 = vmatprep.subr.bf16.mxu0 %v934
  %961 = vmatpush1.bf16.msra.mxu0 %v933
  %962 = vmatprep.subr.bf16.mxu0 %v937
  %963 = vmatpush1.bf16.msra.mxu0 %v936
  %964 = vmatprep.subr.bf16.mxu0 %v940
  %965 = vmatpush1.bf16.msra.mxu0 %v939
  %966 = vmatprep.subr.bf16.mxu0 %v943
  %967 = vmatpush1.bf16.msra.mxu0 %v942
  %968 = vmatprep.subr.bf16.mxu0 0
  %969 = vmatpush1.bf16.msra.mxu0 0
  %970 = vmatprep.subr.bf16.mxu0 0
  %971 = vmatpush1.bf16.msra.mxu0 0
  %972 = vmatprep.subr.bf16.mxu0 0
  %973 = vmatpush1.bf16.msra.mxu0 0
  %974 = vmatprep.subr.bf16.mxu0 0
  %975 = vmatpush1.bf16.msra.mxu0 0
  %976 = vmatprep.subr.bf16.mxu0 0
  %977 = vmatpush1.bf16.msra.mxu0 0
  %978 = vmatprep.subr.bf16.mxu0 0
  %979 = vmatpush1.bf16.msra.mxu0 0
  %980 = vmatprep.subr.bf16.mxu0 0
  %981 = vmatpush1.bf16.msra.mxu0 0
  %982 = vmatprep.subr.bf16.mxu0 0
  %983 = vmatpush1.bf16.msra.mxu0 0
  %984 = vmatprep.subr.bf16.mxu0 0
  %985 = vmatpush1.bf16.msra.mxu0 0
  %986 = vmatprep.subr.bf16.mxu0 0
  %987 = vmatpush1.bf16.msra.mxu0 0
  %988 = vmatprep.subr.bf16.mxu0 0
  %989 = vmatpush1.bf16.msra.mxu0 0
  %990 = vmatprep.subr.bf16.mxu0 0
  %991 = vmatpush1.bf16.msra.mxu0 0
  %992 = vmatprep.mubr.bf16.mxu0 0
  %993 = vmatmul.mubr.bf16.gmra.mrb[0].mxu0 %v958
  %v994 = vpop.f32.mrb[0].mxu0
  %v995 = vadd.f32 0.0, %v994
  %v996 = vpop.f32.mrb[0].mxu0
  %v997 = vadd.f32 0.0, %v996
  %v998 = vpop.f32.mrb[0].mxu0
  %v999 = vadd.f32 0.0, %v998
  %v1000 = vpop.f32.mrb[0].mxu0
  %v1001 = vadd.f32 0.0, %v1000
  %1002 = vdwg.mxu0
  %1003 = vmatprep.subr.bf16.mxu0 0
  %1004 = vmatpush1.bf16.msra.mxu0 %v935
  %1005 = vmatprep.subr.bf16.mxu0 0
  %1006 = vmatpush1.bf16.msra.mxu0 %v938
  %1007 = vmatprep.subr.bf16.mxu0 0
  %1008 = vmatpush1.bf16.msra.mxu0 %v941
  %1009 = vmatprep.subr.bf16.mxu0 0
  %1010 = vmatpush1.bf16.msra.mxu0 %v944
  %1011 = vmatprep.subr.bf16.mxu0 0
  %1012 = vmatpush1.bf16.msra.mxu0 0
  %1013 = vmatprep.subr.bf16.mxu0 0
  %1014 = vmatpush1.bf16.msra.mxu0 0
  %1015 = vmatprep.subr.bf16.mxu0 0
  %1016 = vmatpush1.bf16.msra.mxu0 0
  %1017 = vmatprep.subr.bf16.mxu0 0
  %1018 = vmatpush1.bf16.msra.mxu0 0
  %1019 = vmatprep.subr.bf16.mxu0 0
  %1020 = vmatpush1.bf16.msra.mxu0 0
  %1021 = vmatprep.subr.bf16.mxu0 0
  %1022 = vmatpush1.bf16.msra.mxu0 0
  %1023 = vmatprep.subr.bf16.mxu0 0
  %1024 = vmatpush1.bf16.msra.mxu0 0
  %1025 = vmatprep.subr.bf16.mxu0 0
  %1026 = vmatpush1.bf16.msra.mxu0 0
  %1027 = vmatprep.subr.bf16.mxu0 0
  %1028 = vmatpush1.bf16.msra.mxu0 0
  %1029 = vmatprep.subr.bf16.mxu0 0
  %1030 = vmatpush1.bf16.msra.mxu0 0
  %1031 = vmatprep.subr.bf16.mxu0 0
  %1032 = vmatpush1.bf16.msra.mxu0 0
  %1033 = vmatprep.subr.bf16.mxu0 0
  %1034 = vmatpush1.bf16.msra.mxu0 0
  %1035 = vmatprep.mubr.bf16.mxu0 0
  %1036 = vmatmul.mubr.bf16.gmra.mrb[0].mxu0 %v958
  %v1037 = vpop.f32.mrb[0].mxu0
  %v1038 = vadd.f32 0.0, %v1037
  %v1039 = vpop.f32.mrb[0].mxu0
  %v1040 = vpop.f32.mrb[0].mxu0
  %v1041 = vadd.f32 0.0, %v1040
  %v1042 = vpop.f32.mrb[0].mxu0
  %1043 = vdwg.mxu0
  %v1044 = vmul.f32 %v995, %v44
  %v1045 = vmul.f32 %v999, %v45
  %v1046 = vmul.f32 %v997, %v46
  %v1047 = vmul.f32 %v1001, %v47
  %v1048 = vadd.f32 %v1044, %v1046
  %v1049 = vadd.f32 %v1045, %v1047
  %v1050 = vmul.f32 %v1048, %v268
  %v1051 = vmul.f32 %v1049, %v270
  %v1052 = vmul.f32 %v1048, %v272
  %v1053 = vmul.f32 %v1049, %v274
  %v1054 = vmul.f32 %v1048, %v276
  %v1055 = vmul.f32 %v1049, %v278
  %v1056 = vmul.f32 %v1048, %v280
  %v1057 = vmul.f32 %v1049, %v282
  %v1058 = vpack.c.bf16 %v1051, %v1050
  %v1059 = vpack.c.bf16 %v1053, %v1052
  %v1060 = vpack.c.bf16 %v1055, %v1054
  %v1061 = vpack.c.bf16 %v1057, %v1056
  %v1062 = vmul.f32 %v1038, %v50
  %v1063 = vmul.f32 %v1041, %v51
  %v1064 = vmul.f32 %v1038, %v52
  %v1065 = vmul.f32 %v1041, %v53
  %v1066 = vmul.f32 %v1038, %v54
  %v1067 = vmul.f32 %v1041, %v55
  %v1068 = vmul.f32 %v1038, %v56
  %v1069 = vmul.f32 %v1041, %v57
  %v1070 = vpack.c.bf16 %v1063, %v1062
  %v1071 = vpack.c.bf16 %v1065, %v1064
  %v1072 = vpack.c.bf16 %v1067, %v1066
  %v1073 = vpack.c.bf16 %v1069, %v1068
  %v1074 = vpack.c.bf16 %v1049, %v1048
  %1079 = vrot.lane.b32.xlu0 %v1058, 64
  %v1080 = vpop.permute.xlu0 %1079
  %1081 = vrot.lane.b32.xlu0 %v1059, 64
  %v1082 = vpop.permute.xlu0 %1081
  %1083 = vrot.lane.b32.xlu0 %v1060, 64
  %v1084 = vpop.permute.xlu0 %1083
  %1085 = vrot.lane.b32.xlu0 %v1061, 64
  %v1086 = vpop.permute.xlu0 %1085
  %v1088 = vsel %vm61, %v1074, 0
  %v1091 = vsel %vm61, %v1080, 0
  %v1094 = vsel %vm61, %v1082, 0
  %v1097 = vsel %vm61, %v1084, 0
  %v1100 = vsel %vm61, %v1086, 0
  %1102 = vmatprep.subr.bf16.mxu0 0
  %1103 = vmatpush1.bf16.xpose.msra.mxu0 %v1091
  %1104 = vmatprep.subr.bf16.mxu0 0
  %1105 = vmatpush1.bf16.xpose.msra.mxu0 %v1094
  %1106 = vmatprep.subr.bf16.mxu0 0
  %1107 = vmatpush1.bf16.xpose.msra.mxu0 %v1097
  %1108 = vmatprep.subr.bf16.mxu0 0
  %1109 = vmatpush1.bf16.xpose.msra.mxu0 %v1100
  %1110 = vmatprep.subr.bf16.mxu0 0
  %1111 = vmatpush1.bf16.xpose.msra.mxu0 0
  %1112 = vmatprep.subr.bf16.mxu0 0
  %1113 = vmatpush1.bf16.xpose.msra.mxu0 0
  %1114 = vmatprep.subr.bf16.mxu0 0
  %1115 = vmatpush1.bf16.xpose.msra.mxu0 0
  %1116 = vmatprep.subr.bf16.mxu0 0
  %1117 = vmatpush1.bf16.xpose.msra.mxu0 0
  %1118 = vmatprep.subr.bf16.mxu0 0
  %1119 = vmatpush1.bf16.xpose.msra.mxu0 0
  %1120 = vmatprep.subr.bf16.mxu0 0
  %1121 = vmatpush1.bf16.xpose.msra.mxu0 0
  %1122 = vmatprep.subr.bf16.mxu0 0
  %1123 = vmatpush1.bf16.xpose.msra.mxu0 0
  %1124 = vmatprep.subr.bf16.mxu0 0
  %1125 = vmatpush1.bf16.xpose.msra.mxu0 0
  %1126 = vmatprep.subr.bf16.mxu0 0
  %1127 = vmatpush1.bf16.xpose.msra.mxu0 0
  %1128 = vmatprep.subr.bf16.mxu0 0
  %1129 = vmatpush1.bf16.xpose.msra.mxu0 0
  %1130 = vmatprep.subr.bf16.mxu0 0
  %1131 = vmatpush1.bf16.xpose.msra.mxu0 0
  %1132 = vmatprep.subr.bf16.mxu0 0
  %1133 = vmatpush1.bf16.xpose.msra.mxu0 0
  %1134 = vmatprep.mubr.bf16.mxu0 0
  %1135 = vmatmul.mubr.bf16.gmra.mrb[0].mxu0 %v1088
  %v1136 = vpop.f32.mrb[0].mxu0
  %v1137 = vadd.f32 %v48, %v1136
  %v1138 = vpop.f32.mrb[0].mxu0
  %v1139 = vpop.f32.mrb[0].mxu0
  %v1140 = vadd.f32 %v49, %v1139
  %v1141 = vpop.f32.mrb[0].mxu0
  %1142 = vdwg.mxu0
  %v1143 = vsel %vm61, %v1137, -inf
  %1144 = vmax.xlane.f32.xlu0 %v1143
  %v1145 = vpop.xlane.xlu0 %1144
  %v1146 = vsel %vm61, %v1140, -inf
  %1147 = vmax.xlane.f32.xlu0 %v1146
  %v1148 = vpop.xlane.xlu0 %1147
  %v1149 = vsub.f32 %v1137, %v1145
  %v1150 = vsub.f32 %v1140, %v1148
  %v1151 = vmul.f32 %v1149, 1.442695
  %v1152 = vpow.pop %v1151
  %v1153 = vmul.f32 %v1150, 1.442695
  %v1154 = vpow.pop %v1153
  %v1156 = vsel %vm61, %v1152, 0
  %v1159 = vsel %vm61, %v1154, 0
  %1161 = vmatprep.subr.mxu0 0.0
  %1162 = vmatpush1.msra.mxu0 %v50
  %1163 = vmatprep.subr.mxu0 0.0
  %1164 = vmatpush1.msra.mxu0 %v51
  %1165 = vmatprep.subr.mxu0 0.0
  %1166 = vmatpush1.msra.mxu0 %v52
  %1167 = vmatprep.subr.mxu0 0.0
  %1168 = vmatpush1.msra.mxu0 %v53
  %1169 = vmatprep.subr.mxu0 0.0
  %1170 = vmatpush1.msra.mxu0 %v54
  %1171 = vmatprep.subr.mxu0 0.0
  %1172 = vmatpush1.msra.mxu0 %v55
  %1173 = vmatprep.subr.mxu0 0.0
  %1174 = vmatpush1.msra.mxu0 %v56
  %1175 = vmatprep.subr.mxu0 0.0
  %1176 = vmatpush1.msra.mxu0 %v57
  %1177 = vmatprep.subr.mxu0 0.0
  %1178 = vmatpush1.msra.mxu0 0.0
  %1179 = vmatprep.subr.mxu0 0.0
  %1180 = vmatpush1.msra.mxu0 0.0
  %1181 = vmatprep.subr.mxu0 0.0
  %1182 = vmatpush1.msra.mxu0 0.0
  %1183 = vmatprep.subr.mxu0 0.0
  %1184 = vmatpush1.msra.mxu0 0.0
  %1185 = vmatprep.subr.mxu0 0.0
  %1186 = vmatpush1.msra.mxu0 0.0
  %1187 = vmatprep.subr.mxu0 0.0
  %1188 = vmatpush1.msra.mxu0 0.0
  %1189 = vmatprep.subr.mxu0 0.0
  %1190 = vmatpush1.msra.mxu0 0.0
  %1191 = vmatprep.subr.mxu0 0.0
  %1192 = vmatpush1.msra.mxu0 0.0
  %1193 = vmatprep.subr.mxu0 0.0
  %1194 = vmatpush1.msra.mxu0 0.0
  %1195 = vmatprep.subr.mxu0 0.0
  %1196 = vmatpush1.msra.mxu0 0.0
  %1197 = vmatprep.subr.mxu0 0.0
  %1198 = vmatpush1.msra.mxu0 0.0
  %1199 = vmatprep.subr.mxu0 0.0
  %1200 = vmatpush1.msra.mxu0 0.0
  %1201 = vmatprep.subr.mxu0 0.0
  %1202 = vmatpush1.msra.mxu0 0.0
  %1203 = vmatprep.subr.mxu0 0.0
  %1204 = vmatpush1.msra.mxu0 0.0
  %1205 = vmatprep.subr.mxu0 0.0
  %1206 = vmatpush1.msra.mxu0 0.0
  %1207 = vmatprep.subr.mxu0 0.0
  %1208 = vmatpush1.msra.mxu0 0.0
  %1209 = vmatprep.subr.mxu0 0.0
  %1210 = vmatpush1.msra.mxu0 0.0
  %1211 = vmatprep.subr.mxu0 0.0
  %1212 = vmatpush1.msra.mxu0 0.0
  %1213 = vmatprep.subr.mxu0 0.0
  %1214 = vmatpush1.msra.mxu0 0.0
  %1215 = vmatprep.subr.mxu0 0.0
  %1216 = vmatpush1.msra.mxu0 0.0
  %1217 = vmatprep.subr.mxu0 0.0
  %1218 = vmatpush1.msra.mxu0 0.0
  %1219 = vmatprep.subr.mxu0 0.0
  %1220 = vmatpush1.msra.mxu0 0.0
  %1221 = vmatprep.subr.mxu0 0.0
  %1222 = vmatpush1.msra.mxu0 0.0
  %1223 = vmatprep.subr.mxu0 0.0
  %1224 = vmatpush1.msra.mxu0 0.0
  %1225 = vmatprep.mubr.f32.mxu0 0.0
  %1226 = vmatmul.mubr.f32.gmra.mrb[0].mxu0 %v1156
  %v1227 = vpop.f32.mrb[0].mxu0
  %v1228 = vadd.f32 0.0, %v1227
  %v1229 = vpop.f32.mrb[0].mxu0
  %1230 = vmatprep.mubr.f32.mxu0 0.0
  %1231 = vmatmul.mubr.f32.gmra.mrb[0].mxu0 %v1159
  %v1232 = vpop.f32.mrb[0].mxu0
  %v1233 = vadd.f32 0.0, %v1232
  %v1234 = vpop.f32.mrb[0].mxu0
  %1235 = vdwg.mxu0
  %v1236 = vpack.c.bf16 %v1154, %v1152
  %v1238 = vsel %vm61, %v1236, 0
  %1240 = vmatprep.subr.bf16.mxu0 0
  %1241 = vmatpush1.bf16.msra.mxu0 %v1070
  %1242 = vmatprep.subr.bf16.mxu0 0
  %1243 = vmatpush1.bf16.msra.mxu0 %v1071
  %1244 = vmatprep.subr.bf16.mxu0 0
  %1245 = vmatpush1.bf16.msra.mxu0 %v1072
  %1246 = vmatprep.subr.bf16.mxu0 0
  %1247 = vmatpush1.bf16.msra.mxu0 %v1073
  %1248 = vmatprep.subr.bf16.mxu0 0
  %1249 = vmatpush1.bf16.msra.mxu0 0
  %1250 = vmatprep.subr.bf16.mxu0 0
  %1251 = vmatpush1.bf16.msra.mxu0 0
  %1252 = vmatprep.subr.bf16.mxu0 0
  %1253 = vmatpush1.bf16.msra.mxu0 0
  %1254 = vmatprep.subr.bf16.mxu0 0
  %1255 = vmatpush1.bf16.msra.mxu0 0
  %1256 = vmatprep.subr.bf16.mxu0 0
  %1257 = vmatpush1.bf16.msra.mxu0 0
  %1258 = vmatprep.subr.bf16.mxu0 0
  %1259 = vmatpush1.bf16.msra.mxu0 0
  %1260 = vmatprep.subr.bf16.mxu0 0
  %1261 = vmatpush1.bf16.msra.mxu0 0
  %1262 = vmatprep.subr.bf16.mxu0 0
  %1263 = vmatpush1.bf16.msra.mxu0 0
  %1264 = vmatprep.subr.bf16.mxu0 0
  %1265 = vmatpush1.bf16.msra.mxu0 0
  %1266 = vmatprep.subr.bf16.mxu0 0
  %1267 = vmatpush1.bf16.msra.mxu0 0
  %1268 = vmatprep.subr.bf16.mxu0 0
  %1269 = vmatpush1.bf16.msra.mxu0 0
  %1270 = vmatprep.subr.bf16.mxu0 0
  %1271 = vmatpush1.bf16.msra.mxu0 0
  %1272 = vmatprep.mubr.bf16.mxu0 0
  %1273 = vmatmul.mubr.bf16.gmra.mrb[0].mxu0 %v1238
  %v1274 = vpop.f32.mrb[0].mxu0
  %v1275 = vadd.f32 0.0, %v1274
  %v1276 = vpop.f32.mrb[0].mxu0
  %v1277 = vpop.f32.mrb[0].mxu0
  %v1278 = vadd.f32 0.0, %v1277
  %v1279 = vpop.f32.mrb[0].mxu0
  %1280 = vdwg.mxu0
  %v1281 = vrcp.pop %v1228
  %v1282 = vrcp.pop %v1233
  %v1283 = vmul.f32 %v1275, %v1281
  %v1284 = vmul.f32 %v1278, %v1282
  %v1285 = vpack.c.bf16 %v1284, %v1283
  %s1286 = scalar_lea.vmem %s7, 32
  %v1287 = vld [vmem:[%s1286] sm:$0xf]
  %v1288 = vld [vmem:[%s1286 + $0x4] sm:$0xf]
  %v1289 = vld [vmem:[%s1286 + $0x8] sm:$0xf]
  %v1290 = vld [vmem:[%s1286 + $0xc] sm:$0xf]
  %v1291 = vld [vmem:[%s1286 + $0x10] sm:$0xf]
  %v1292 = vld [vmem:[%s1286 + $0x14] sm:$0xf]
  %v1293 = vld [vmem:[%s1286 + $0x18] sm:$0xf]
  %v1294 = vld [vmem:[%s1286 + $0x1c] sm:$0xf]
  %v1303 = vunpack.c.l.b16 %v1287
  %v1304 = vunpack.c.l.b16 %v1288
  %v1305 = vunpack.c.l.b16 %v1289
  %v1306 = vunpack.c.l.b16 %v1290
  %v1307 = vunpack.c.l.b16 %v1291
  %v1308 = vunpack.c.l.b16 %v1292
  %v1309 = vunpack.c.l.b16 %v1293
  %v1310 = vunpack.c.l.b16 %v1294
  %v1311 = vpack.c.b16 %v1304, %v1303
  %v1312 = vpack.c.b16 %v1306, %v1305
  %v1313 = vpack.c.b16 %v1308, %v1307
  %v1314 = vpack.c.b16 %v1310, %v1309
  %v1320 = vsel %vm61, %v1285, 0
  %1322 = vmatprep.subr.bf16.mxu0 0
  %1323 = vmatpush1.bf16.msra.mxu0 %v1311
  %1324 = vmatprep.subr.bf16.mxu0 0
  %1325 = vmatpush1.bf16.msra.mxu0 %v1312
  %1326 = vmatprep.subr.bf16.mxu0 0
  %1327 = vmatpush1.bf16.msra.mxu0 %v1313
  %1328 = vmatprep.subr.bf16.mxu0 0
  %1329 = vmatpush1.bf16.msra.mxu0 %v1314
  %1330 = vmatprep.subr.bf16.mxu0 0
  %1331 = vmatpush1.bf16.msra.mxu0 0
  %1332 = vmatprep.subr.bf16.mxu0 0
  %1333 = vmatpush1.bf16.msra.mxu0 0
  %1334 = vmatprep.subr.bf16.mxu0 0
  %1335 = vmatpush1.bf16.msra.mxu0 0
  %1336 = vmatprep.subr.bf16.mxu0 0
  %1337 = vmatpush1.bf16.msra.mxu0 0
  %1338 = vmatprep.subr.bf16.mxu0 0
  %1339 = vmatpush1.bf16.msra.mxu0 0
  %1340 = vmatprep.subr.bf16.mxu0 0
  %1341 = vmatpush1.bf16.msra.mxu0 0
  %1342 = vmatprep.subr.bf16.mxu0 0
  %1343 = vmatpush1.bf16.msra.mxu0 0
  %1344 = vmatprep.subr.bf16.mxu0 0
  %1345 = vmatpush1.bf16.msra.mxu0 0
  %1346 = vmatprep.subr.bf16.mxu0 0
  %1347 = vmatpush1.bf16.msra.mxu0 0
  %1348 = vmatprep.subr.bf16.mxu0 0
  %1349 = vmatpush1.bf16.msra.mxu0 0
  %1350 = vmatprep.subr.bf16.mxu0 0
  %1351 = vmatpush1.bf16.msra.mxu0 0
  %1352 = vmatprep.subr.bf16.mxu0 0
  %1353 = vmatpush1.bf16.msra.mxu0 0
  %1354 = vmatprep.mubr.bf16.mxu0 0
  %1355 = vmatmul.mubr.bf16.gmra.mrb[0].mxu0 %v1320
  %v1356 = vpop.f32.mrb[0].mxu0
  %v1357 = vadd.f32 0.0, %v1356
  %v1358 = vpop.f32.mrb[0].mxu0
  %v1359 = vpop.f32.mrb[0].mxu0
  %v1360 = vadd.f32 0.0, %v1359
  %v1361 = vpop.f32.mrb[0].mxu0
  %1362 = vdwg.mxu0
  %v1363 = vadd.f32 %v847, %v1357
  %v1364 = vadd.f32 %v848, %v1360
  %s1365 = scalar_lea.vmem %s8, 1
  %v1366 = vld [vmem:[%s1365] sm:$0x1]
  %v1367 = vmul.f32 %v1363, %v1363
  %v1368 = vmul.f32 %v1364, %v1364
  %v1369 = vsel %vm61, %v1367, 0.0
  %1370 = vadd.xlane.f32.xlu0 %v1369
  %v1371 = vpop.xlane.xlu0 %1370
  %v1372 = vsel %vm61, %v1368, 0.0
  %1373 = vadd.xlane.f32.xlu0 %v1372
  %v1374 = vpop.xlane.xlu0 %1373
  %v1375 = vmul.f32 %v1371, %v68
  %v1376 = vmul.f32 %v1374, %v68
  %v1377 = vadd.f32 %v1375, 1e-06
  %v1378 = vadd.f32 %v1376, 1e-06
  %v1379 = vrsqrt.pop %v1377
  %v1380 = vrsqrt.pop %v1378
  %v1381 = vmul.f32 %v1363, %v1379
  %v1382 = vmul.f32 %v1364, %v1380
  %v1384 = vlaneseq
  %v1385 = vshrl.u32 %v1384, 7
  %v1386 = vsub.s32 0, %v1385
  %v1387 = vrot.slane %v1366, %v1386
  %v1389 = vmul.f32 %v1381, %v1387
  %v1390 = vmul.f32 %v1382, %v1387
  %v1391 = vpack.c.bf16 %v1390, %v1389
  %s1392 = scalar_lea.vmem %s9, 64
  %v1393 = vld [vmem:[%s1392] sm:$0xff]
  %v1394 = vld [vmem:[%s1392 + $0x8] sm:$0xff]
  %v1395 = vld [vmem:[%s1392 + $0x10] sm:$0xff]
  %v1396 = vld [vmem:[%s1392 + $0x18] sm:$0xff]
  %v1397 = vld [vmem:[%s1392 + $0x20] sm:$0xff]
  %v1398 = vld [vmem:[%s1392 + $0x28] sm:$0xff]
  %v1399 = vld [vmem:[%s1392 + $0x30] sm:$0xff]
  %v1400 = vld [vmem:[%s1392 + $0x38] sm:$0xff]
  %v1409 = vunpack.c.l.b16 %v1393
  %v1410 = vunpack.c.h.b16 %v1393
  %v1411 = vunpack.c.l.b16 %v1394
  %v1412 = vunpack.c.h.b16 %v1394
  %v1413 = vunpack.c.l.b16 %v1395
  %v1414 = vunpack.c.h.b16 %v1395
  %v1415 = vunpack.c.l.b16 %v1396
  %v1416 = vunpack.c.h.b16 %v1396
  %v1417 = vunpack.c.l.b16 %v1397
  %v1418 = vunpack.c.h.b16 %v1397
  %v1419 = vunpack.c.l.b16 %v1398
  %v1420 = vunpack.c.h.b16 %v1398
  %v1421 = vunpack.c.l.b16 %v1399
  %v1422 = vunpack.c.h.b16 %v1399
  %v1423 = vunpack.c.l.b16 %v1400
  %v1424 = vunpack.c.h.b16 %v1400
  %v1425 = vpack.c.b16 %v1411, %v1409
  %v1426 = vpack.c.b16 %v1412, %v1410
  %v1427 = vpack.c.b16 %v1415, %v1413
  %v1428 = vpack.c.b16 %v1416, %v1414
  %v1429 = vpack.c.b16 %v1419, %v1417
  %v1430 = vpack.c.b16 %v1420, %v1418
  %v1431 = vpack.c.b16 %v1423, %v1421
  %v1432 = vpack.c.b16 %v1424, %v1422
  %v1442 = vsel %vm61, %v1391, 0
  %1444 = vmatprep.subr.bf16.mxu0 %v1426
  %1445 = vmatpush1.bf16.msra.mxu0 %v1425
  %1446 = vmatprep.subr.bf16.mxu0 %v1428
  %1447 = vmatpush1.bf16.msra.mxu0 %v1427
  %1448 = vmatprep.subr.bf16.mxu0 %v1430
  %1449 = vmatpush1.bf16.msra.mxu0 %v1429
  %1450 = vmatprep.subr.bf16.mxu0 %v1432
  %1451 = vmatpush1.bf16.msra.mxu0 %v1431
  %1452 = vmatprep.subr.bf16.mxu0 0
  %1453 = vmatpush1.bf16.msra.mxu0 0
  %1454 = vmatprep.subr.bf16.mxu0 0
  %1455 = vmatpush1.bf16.msra.mxu0 0
  %1456 = vmatprep.subr.bf16.mxu0 0
  %1457 = vmatpush1.bf16.msra.mxu0 0
  %1458 = vmatprep.subr.bf16.mxu0 0
  %1459 = vmatpush1.bf16.msra.mxu0 0
  %1460 = vmatprep.subr.bf16.mxu0 0
  %1461 = vmatpush1.bf16.msra.mxu0 0
  %1462 = vmatprep.subr.bf16.mxu0 0
  %1463 = vmatpush1.bf16.msra.mxu0 0
  %1464 = vmatprep.subr.bf16.mxu0 0
  %1465 = vmatpush1.bf16.msra.mxu0 0
  %1466 = vmatprep.subr.bf16.mxu0 0
  %1467 = vmatpush1.bf16.msra.mxu0 0
  %1468 = vmatprep.subr.bf16.mxu0 0
  %1469 = vmatpush1.bf16.msra.mxu0 0
  %1470 = vmatprep.subr.bf16.mxu0 0
  %1471 = vmatpush1.bf16.msra.mxu0 0
  %1472 = vmatprep.subr.bf16.mxu0 0
  %1473 = vmatpush1.bf16.msra.mxu0 0
  %1474 = vmatprep.subr.bf16.mxu0 0
  %1475 = vmatpush1.bf16.msra.mxu0 0
  %1476 = vmatprep.mubr.bf16.mxu0 0
  %1477 = vmatmul.mubr.bf16.gmra.mrb[0].mxu0 %v1442
  %v1478 = vpop.f32.mrb[0].mxu0
  %v1479 = vadd.f32 0.0, %v1478
  %v1480 = vpop.f32.mrb[0].mxu0
  %v1481 = vadd.f32 0.0, %v1480
  %v1482 = vpop.f32.mrb[0].mxu0
  %v1483 = vadd.f32 0.0, %v1482
  %v1484 = vpop.f32.mrb[0].mxu0
  %v1485 = vadd.f32 0.0, %v1484
  %1486 = vdwg.mxu0
  %v1487 = vxor.u32 %v1479, 2147483648
  %v1488 = vxor.u32 %v1483, 2147483648
  %v1489 = vmul.f32 %v1487, 1.442695
  %v1490 = vpow.pop %v1489
  %v1491 = vmul.f32 %v1488, 1.442695
  %v1492 = vpow.pop %v1491
  %v1493 = vadd.f32 %v1490, 1.0
  %v1494 = vadd.f32 %v1492, 1.0
  %v1495 = vrcp.pop %v1493
  %v1496 = vmul.f32 1.0, %v1495
  %v1497 = vrcp.pop %v1494
  %v1498 = vmul.f32 1.0, %v1497
  %v1499 = vmul.f32 %v1479, %v1496
  %v1500 = vmul.f32 %v1483, %v1498
  %v1501 = vmul.f32 %v1499, %v1481
  %v1502 = vmul.f32 %v1500, %v1485
  %v1503 = vpack.c.bf16 %v1502, %v1501
  %s1504 = scalar_lea.vmem %s10, 64
  %v1505 = vld [vmem:[%s1504] sm:$0xf]
  %v1506 = vld [vmem:[%s1504 + $0x4] sm:$0xf]
  %v1507 = vld [vmem:[%s1504 + $0x8] sm:$0xf]
  %v1508 = vld [vmem:[%s1504 + $0xc] sm:$0xf]
  %v1509 = vld [vmem:[%s1504 + $0x10] sm:$0xf]
  %v1510 = vld [vmem:[%s1504 + $0x14] sm:$0xf]
  %v1511 = vld [vmem:[%s1504 + $0x18] sm:$0xf]
  %v1512 = vld [vmem:[%s1504 + $0x1c] sm:$0xf]
  %v1513 = vld [vmem:[%s1504 + $0x20] sm:$0xf]
  %v1514 = vld [vmem:[%s1504 + $0x24] sm:$0xf]
  %v1515 = vld [vmem:[%s1504 + $0x28] sm:$0xf]
  %v1516 = vld [vmem:[%s1504 + $0x2c] sm:$0xf]
  %v1517 = vld [vmem:[%s1504 + $0x30] sm:$0xf]
  %v1518 = vld [vmem:[%s1504 + $0x34] sm:$0xf]
  %v1519 = vld [vmem:[%s1504 + $0x38] sm:$0xf]
  %v1520 = vld [vmem:[%s1504 + $0x3c] sm:$0xf]
  %v1537 = vunpack.c.l.b16 %v1505
  %v1538 = vunpack.c.l.b16 %v1506
  %v1539 = vunpack.c.l.b16 %v1507
  %v1540 = vunpack.c.l.b16 %v1508
  %v1541 = vunpack.c.l.b16 %v1509
  %v1542 = vunpack.c.l.b16 %v1510
  %v1543 = vunpack.c.l.b16 %v1511
  %v1544 = vunpack.c.l.b16 %v1512
  %v1545 = vunpack.c.l.b16 %v1513
  %v1546 = vunpack.c.l.b16 %v1514
  %v1547 = vunpack.c.l.b16 %v1515
  %v1548 = vunpack.c.l.b16 %v1516
  %v1549 = vunpack.c.l.b16 %v1517
  %v1550 = vunpack.c.l.b16 %v1518
  %v1551 = vunpack.c.l.b16 %v1519
  %v1552 = vunpack.c.l.b16 %v1520
  %v1553 = vpack.c.b16 %v1538, %v1537
  %v1554 = vpack.c.b16 %v1540, %v1539
  %v1555 = vpack.c.b16 %v1542, %v1541
  %v1556 = vpack.c.b16 %v1544, %v1543
  %v1557 = vpack.c.b16 %v1546, %v1545
  %v1558 = vpack.c.b16 %v1548, %v1547
  %v1559 = vpack.c.b16 %v1550, %v1549
  %v1560 = vpack.c.b16 %v1552, %v1551
  %1569 = vmatprep.subr.bf16.mxu0 0
  %1570 = vmatpush1.bf16.msra.mxu0 %v1553
  %1571 = vmatprep.subr.bf16.mxu0 0
  %1572 = vmatpush1.bf16.msra.mxu0 %v1554
  %1573 = vmatprep.subr.bf16.mxu0 0
  %1574 = vmatpush1.bf16.msra.mxu0 %v1555
  %1575 = vmatprep.subr.bf16.mxu0 0
  %1576 = vmatpush1.bf16.msra.mxu0 %v1556
  %1577 = vmatprep.subr.bf16.mxu0 0
  %1578 = vmatpush1.bf16.msra.mxu0 %v1557
  %1579 = vmatprep.subr.bf16.mxu0 0
  %1580 = vmatpush1.bf16.msra.mxu0 %v1558
  %1581 = vmatprep.subr.bf16.mxu0 0
  %1582 = vmatpush1.bf16.msra.mxu0 %v1559
  %1583 = vmatprep.subr.bf16.mxu0 0
  %1584 = vmatpush1.bf16.msra.mxu0 %v1560
  %1585 = vmatprep.subr.bf16.mxu0 0
  %1586 = vmatpush1.bf16.msra.mxu0 0
  %1587 = vmatprep.subr.bf16.mxu0 0
  %1588 = vmatpush1.bf16.msra.mxu0 0
  %1589 = vmatprep.subr.bf16.mxu0 0
  %1590 = vmatpush1.bf16.msra.mxu0 0
  %1591 = vmatprep.subr.bf16.mxu0 0
  %1592 = vmatpush1.bf16.msra.mxu0 0
  %1593 = vmatprep.subr.bf16.mxu0 0
  %1594 = vmatpush1.bf16.msra.mxu0 0
  %1595 = vmatprep.subr.bf16.mxu0 0
  %1596 = vmatpush1.bf16.msra.mxu0 0
  %1597 = vmatprep.subr.bf16.mxu0 0
  %1598 = vmatpush1.bf16.msra.mxu0 0
  %1599 = vmatprep.subr.bf16.mxu0 0
  %1600 = vmatpush1.bf16.msra.mxu0 0
  %1601 = vmatprep.mubr.bf16.mxu0 0
  %1602 = vmatmul.mubr.bf16.gmra.mrb[0].mxu0 %v1503
  %v1603 = vpop.f32.mrb[0].mxu0
  %v1604 = vadd.f32 0.0, %v1603
  %v1605 = vpop.f32.mrb[0].mxu0
  %v1606 = vpop.f32.mrb[0].mxu0
  %v1607 = vadd.f32 0.0, %v1606
  %v1608 = vpop.f32.mrb[0].mxu0
  %1609 = vdwg.mxu0
  %v1610 = vadd.f32 %v1363, %v1604
  %v1611 = vadd.f32 %v1364, %v1607
  %v1612 = vld [vmem:[%s11] sm:$0x1]
  %v1613 = vmul.f32 %v1610, %v1610
  %v1614 = vmul.f32 %v1611, %v1611
  %v1615 = vsel %vm61, %v1613, 0.0
  %1616 = vadd.xlane.f32.xlu0 %v1615
  %v1617 = vpop.xlane.xlu0 %1616
  %v1618 = vsel %vm61, %v1614, 0.0
  %1619 = vadd.xlane.f32.xlu0 %v1618
  %v1620 = vpop.xlane.xlu0 %1619
  %v1621 = vmul.f32 %v1617, %v68
  %v1622 = vmul.f32 %v1620, %v68
  %v1623 = vadd.f32 %v1621, 1e-06
  %v1624 = vadd.f32 %v1622, 1e-06
  %v1625 = vrsqrt.pop %v1623
  %v1626 = vrsqrt.pop %v1624
  %v1627 = vmul.f32 %v1610, %v1625
  %v1628 = vmul.f32 %v1611, %v1626
  %v1630 = vlaneseq
  %v1631 = vshrl.u32 %v1630, 7
  %v1632 = vsub.s32 0, %v1631
  %v1633 = vrot.slane %v1612, %v1632
  %v1635 = vmul.f32 %v1627, %v1633
  %v1636 = vmul.f32 %v1628, %v1633
  %1638 = vrot.lane.b32.xlu0 %v1636, 64
  %v1639 = vpop.permute.xlu0 %1638
  %v1641 = vsel %vm61, %v1635, %v1639
  %1642 = vst [vmem:[%s12] sm:$0xff] %v1641
  // Predicated region
  $region50: #{llama_forward.1} parent=0 // pred_check
    _
  $region51: #{llama_forward.1} parent=0 // pred_check_branch
    %1644 = sbr.rel (0) target = $region53
  $region52: #{llama_forward.1} parent=0 // pred_region
    _
  $region53: #{llama_forward.1} parent=0 // pred_fallthru
    _
  // Predicated region
  $region54: #{llama_forward.1} parent=0 // pred_check
    _
  $region55: #{llama_forward.1} parent=0 // pred_check_branch
    %1646 = sbr.rel (0) target = $region57
  $region56: #{llama_forward.1} parent=0 // pred_region
    _
  $region57: #{llama_forward.1} parent=0 // pred_fallthru
    _

</llo_original>
